<compile_context>
chip_gen: v7x
topology: tpu7x:2x2x1
jax: 0.10.0
libtpu: 0.0.40
codegen_flags: <defaults>
</compile_context>

<pallas_src>
import jax
import jax.numpy as jnp
from jax.experimental import pallas as pl
from jax.experimental.pallas import tpu as pltpu


def _round_up(a, b):
    return (a + b - 1) // b * b


# ---------------------------------------------------------------------------
# Pallas kernels
# ---------------------------------------------------------------------------
def _conv_pool_kernel(p_ref, w_ref, b_ref, o_ref):
    """Fused conv-GEMM + 2x2 maxpool + bias + ReLU.

    p_ref: (4, K_pad, CT) bf16   -- patches for the 4 pool positions
    w_ref: (OC_pad, K_pad) bf16
    b_ref: (OC_pad, 1) f32
    o_ref: (OC_pad, CT) f32      -- lane-dense pooled output tile
    """
    w = w_ref[...]
    s = jnp.dot(w, p_ref[0], preferred_element_type=jnp.float32)
    for q in range(1, 4):
        s = jnp.maximum(s, jnp.dot(w, p_ref[q], preferred_element_type=jnp.float32))
    # relu(max_q(W @ p_q) + b) == maxpool(relu(conv + b))  (monotone epilogue)
    o_ref[...] = jnp.maximum(s + b_ref[...], 0.0)


def _mlp_kernel(x_ref, w1_ref, b1_ref, w2_ref, b2_ref, w3_ref, b3_ref, o_ref):
    """fc1+ReLU -> fc2+ReLU -> fc3, all in one kernel (weights VMEM-resident)."""
    h = jnp.dot(x_ref[...], w1_ref[...], preferred_element_type=jnp.float32)
    h = jnp.maximum(h + b1_ref[...], 0.0)
    h = jnp.dot(h.astype(jnp.bfloat16), w2_ref[...], preferred_element_type=jnp.float32)
    h = jnp.maximum(h + b2_ref[...], 0.0)
    h = jnp.dot(h.astype(jnp.bfloat16), w3_ref[...], preferred_element_type=jnp.float32)
    o_ref[...] = h + b3_ref[...]


# ---------------------------------------------------------------------------
# Wrappers
# ---------------------------------------------------------------------------
def conv_relu_pool(x, w_mat, bias, *, oc, kh=5, kw=5):
    """Valid 5x5 conv + ReLU + 2x2/2 maxpool, fused into one Pallas GEMM.

    x:     (N, C, H, W) float32
    w_mat: (OC_pad, K_pad) bf16   (pre-reshaped / zero-padded weights)
    bias:  (OC_pad, 1) float32
    returns (N, oc, Hp, Wp) float32
    """
    n, c, h, w = x.shape
    oc_pad, k_pad = w_mat.shape
    k = c * kh * kw
    ho, wo = h - kh + 1, w - kw + 1
    hp, wp = ho // 2, wo // 2
    ncols = n * hp * wp
    ct = min(512, _round_up(ncols, 128))      # column tile (lane axis), mult of 128
    nc_pad = _round_up(ncols, ct)

    # im2col glue (XLA): build patches for the 4 pool positions, columns are
    # (n, hp, wp) flattened batch-major so the GEMM output is lane-dense.
    xb = x.astype(jnp.bfloat16)
    cols = []
    for i in range(kh):
        for j in range(kw):
            cols.append(xb[:, :, i:i + ho, j:j + wo])
    p = jnp.stack(cols, axis=2).reshape(n, k, ho, wo)            # (N, K, Ho, Wo)
    quads = jnp.stack(
        [p[:, :, 0::2, 0::2], p[:, :, 0::2, 1::2],
         p[:, :, 1::2, 0::2], p[:, :, 1::2, 1::2]], axis=0)      # (4, N, K, Hp, Wp)
    quads = quads.transpose(0, 2, 1, 3, 4).reshape(4, k, ncols)  # (4, K, N*Hp*Wp)
    quads = jnp.pad(quads, ((0, 0), (0, k_pad - k), (0, nc_pad - ncols)))

    flops = 2 * 4 * oc_pad * k_pad * nc_pad
    bytes_accessed = (quads.size * 2 + w_mat.size * 2 + bias.size * 4
                      + oc_pad * nc_pad * 4)

    out = pl.pallas_call(
        _conv_pool_kernel,
        out_shape=jax.ShapeDtypeStruct((oc_pad, nc_pad), jnp.float32),
        grid_spec=pltpu.PrefetchScalarGridSpec(
            num_scalar_prefetch=0,
            grid=(nc_pad // ct,),
            in_specs=[
                pl.BlockSpec((4, k_pad, ct), lambda j: (0, 0, j)),
                pl.BlockSpec((oc_pad, k_pad), lambda j: (0, 0)),
                pl.BlockSpec((oc_pad, 1), lambda j: (0, 0)),
            ],
            out_specs=pl.BlockSpec((oc_pad, ct), lambda j: (0, j)),
        ),
        compiler_params=pltpu.CompilerParams(
            dimension_semantics=("parallel",),
            vmem_limit_bytes=32 * 1024 * 1024,
        ),
        cost_estimate=pl.CostEstimate(
            flops=flops, transcendentals=0, bytes_accessed=bytes_accessed),
    )(quads, w_mat, bias)

    out = out[:oc, :ncols].reshape(oc, n, hp, wp).transpose(1, 0, 2, 3)
    return out


def mlp_head(x, fc1_w, fc1_b, fc2_w, fc2_b, fc3_w, fc3_b, *, n_classes=10):
    """Fused fc1/fc2/fc3 head. x: (N, 400) f32 -> (N, n_classes) f32."""
    n, k = x.shape
    if n <= 256:
        bt, n_pad = n, n
    else:
        bt = 256
        n_pad = _round_up(n, bt)
    xb = x.astype(jnp.bfloat16)
    if n_pad != n:
        xb = jnp.pad(xb, ((0, n_pad - n), (0, 0)))
    h1 = fc1_w.shape[1]                     # padded hidden width (128)

    flops = 2 * n_pad * (k * h1 + h1 * h1 + h1 * h1)
    bytes_accessed = (xb.size * 2
                      + (fc1_w.size + fc2_w.size + fc3_w.size) * 2
                      + (fc1_b.size + fc2_b.size + fc3_b.size) * 4
                      + n_pad * h1 * 4)

    out = pl.pallas_call(
        _mlp_kernel,
        out_shape=jax.ShapeDtypeStruct((n_pad, h1), jnp.float32),
        grid_spec=pltpu.PrefetchScalarGridSpec(
            num_scalar_prefetch=0,
            grid=(n_pad // bt,),
            in_specs=[
                pl.BlockSpec((bt, k), lambda i: (i, 0)),
                pl.BlockSpec(fc1_w.shape, lambda i: (0, 0)),
                pl.BlockSpec(fc1_b.shape, lambda i: (0, 0)),
                pl.BlockSpec(fc2_w.shape, lambda i: (0, 0)),
                pl.BlockSpec(fc2_b.shape, lambda i: (0, 0)),
                pl.BlockSpec(fc3_w.shape, lambda i: (0, 0)),
                pl.BlockSpec(fc3_b.shape, lambda i: (0, 0)),
            ],
            out_specs=pl.BlockSpec((bt, h1), lambda i: (i, 0)),
        ),
        compiler_params=pltpu.CompilerParams(
            dimension_semantics=("parallel",),
            vmem_limit_bytes=32 * 1024 * 1024,
        ),
        cost_estimate=pl.CostEstimate(
            flops=flops, transcendentals=0, bytes_accessed=bytes_accessed),
    )(xb, fc1_w, fc1_b, fc2_w, fc2_b, fc3_w, fc3_b)
    return out[:n, :n_classes]


# ---------------------------------------------------------------------------
# Parameters: PyTorch-shaped init + one-time GEMM-layout preparation
# ---------------------------------------------------------------------------
def init_params(key):
    def uniform(key, shape, fan_in):
        bound = 1.0 / jnp.sqrt(float(fan_in))
        return jax.random.uniform(key, shape, jnp.float32, -bound, bound)

    ks = jax.random.split(key, 10)
    return {
        "conv1_w": uniform(ks[0], (6, 3, 5, 5), 3 * 5 * 5),
        "conv1_b": uniform(ks[1], (6,), 3 * 5 * 5),
        "conv2_w": uniform(ks[2], (16, 6, 5, 5), 6 * 5 * 5),
        "conv2_b": uniform(ks[3], (16,), 6 * 5 * 5),
        "fc1_w": uniform(ks[4], (120, 400), 400),
        "fc1_b": uniform(ks[5], (120,), 400),
        "fc2_w": uniform(ks[6], (84, 120), 120),
        "fc2_b": uniform(ks[7], (84,), 120),
        "fc3_w": uniform(ks[8], (10, 84), 84),
        "fc3_b": uniform(ks[9], (10,), 84),
    }


def prepare_params(params):
    """One-time: reshape/transpose/zero-pad weights into the kernel GEMM layouts."""
    def pad2(a, rows, cols):
        return jnp.pad(a, ((0, rows - a.shape[0]), (0, cols - a.shape[1])))

    def bias_col(b, rows):
        return jnp.pad(b, (0, rows - b.shape[0])).reshape(rows, 1).astype(jnp.float32)

    def bias_row(b, cols):
        return jnp.pad(b, (0, cols - b.shape[0])).reshape(1, cols).astype(jnp.float32)

    return {
        # conv1: K = 3*5*5 = 75 -> 128, OC 6 -> 16 (zero rows sliced off later)
        "conv1_w": pad2(params["conv1_w"].reshape(6, 75), 16, 128).astype(jnp.bfloat16),
        "conv1_b": bias_col(params["conv1_b"], 16),
        # conv2: K = 6*5*5 = 150 -> 256, OC = 16
        "conv2_w": pad2(params["conv2_w"].reshape(16, 150), 16, 256).astype(jnp.bfloat16),
        "conv2_b": bias_col(params["conv2_b"], 16),
        # fc weights stored pre-transposed (K, N) and padded to lane-friendly widths
        "fc1_w": pad2(params["fc1_w"].T, 400, 128).astype(jnp.bfloat16),
        "fc1_b": bias_row(params["fc1_b"], 128),
        "fc2_w": pad2(params["fc2_w"].T, 128, 128).astype(jnp.bfloat16),
        "fc2_b": bias_row(params["fc2_b"], 128),
        "fc3_w": pad2(params["fc3_w"].T, 128, 128).astype(jnp.bfloat16),
        "fc3_b": bias_row(params["fc3_b"], 128),
    }


# ---------------------------------------------------------------------------
# Forward pass (mirrors Net.forward)
# ---------------------------------------------------------------------------
@jax.jit
def net_forward(prep, x):
    # x: (N, 3, 32, 32) NCHW float32
    x = conv_relu_pool(x, prep["conv1_w"], prep["conv1_b"], oc=6)    # (N, 6, 14, 14)
    x = conv_relu_pool(x, prep["conv2_w"], prep["conv2_b"], oc=16)   # (N, 16, 5, 5)
    n = x.shape[0]
    x = x.reshape(n, 16 * 5 * 5)                                     # (N, 400), C-H-W order
    return mlp_head(x, prep["fc1_w"], prep["fc1_b"],
                    prep["fc2_w"], prep["fc2_b"],
                    prep["fc3_w"], prep["fc3_b"])                    # (N, 10)


if __name__ == "__main__":
    key = jax.random.PRNGKey(0)
    pkey, xkey = jax.random.split(key)
    params = init_params(pkey)
    prep = prepare_params(params)
    # Net implies 32x32 input: 32 -conv5-> 28 -pool-> 14 -conv5-> 10 -pool-> 5
    x = jax.random.normal(xkey, (2, 3, 32, 32), dtype=jnp.float32)
    out = net_forward(prep, x)
    jax.block_until_ready(out)
    assert out.shape == (2, 10), out.shape
    print("KERNEL_OK")
</pallas_src>

<mosaic_0001>
module attributes {stable_mosaic.version = 11 : i64} {
  func.func @_conv_pool_kernel(%arg0: i32, %arg1: memref<4x128x512xbf16, #tpu.memory_space<vmem>>, %arg2: memref<16x128xbf16, #tpu.memory_space<vmem>>, %arg3: memref<16x1xf32, #tpu.memory_space<vmem>>, %arg4: memref<16x512xf32, #tpu.memory_space<vmem>>) attributes {dimension_semantics = [#tpu.dimension_semantics<parallel>], iteration_bounds = array<i64: 1>, scalar_prefetch = 0 : i64, scratch_operands = 0 : i64, tpu.core_type = #tpu.core_type<tc>, window_params = [{transform_indices = @transform_0, window_bounds = array<i64: 4, 128, 512>}, {pipeline_mode = #tpu.pipeline_mode<synchronous>, transform_indices = @transform_1, window_bounds = array<i64: 16, 128>}, {pipeline_mode = #tpu.pipeline_mode<synchronous>, transform_indices = @transform_2, window_bounds = array<i64: 16, 1>}, {transform_indices = @transform_3, window_bounds = array<i64: 16, 512>}]} {
    %c0 = arith.constant 0 : index
    %c0_0 = arith.constant 0 : index
    %0 = vector.load %arg2[%c0, %c0_0] : memref<16x128xbf16, #tpu.memory_space<vmem>>, vector<16x128xbf16>
    %c0_1 = arith.constant 0 : index
    %c0_2 = arith.constant 0 : index
    %c0_3 = arith.constant 0 : index
    %1 = vector.load %arg1[%c0_1, %c0_2, %c0_3] : memref<4x128x512xbf16, #tpu.memory_space<vmem>>, vector<1x128x512xbf16>
    %2 = vector.shape_cast %1 : vector<1x128x512xbf16> to vector<128x512xbf16>
    %cst = arith.constant dense<0.000000e+00> : vector<16x512xf32>
    %3 = tpu.matmul %0, %2, %cst {dimension_numbers = #tpu.dot_dimension_numbers<[1], [0], [0], [1], [0, 0, 1, 1], [], []>} : vector<16x128xbf16>, vector<128x512xbf16>, vector<16x512xf32> -> vector<16x512xf32>
    %c1 = arith.constant 1 : index
    %c0_4 = arith.constant 0 : index
    %c0_5 = arith.constant 0 : index
    %4 = vector.load %arg1[%c1, %c0_4, %c0_5] : memref<4x128x512xbf16, #tpu.memory_space<vmem>>, vector<1x128x512xbf16>
    %5 = vector.shape_cast %4 : vector<1x128x512xbf16> to vector<128x512xbf16>
    %cst_6 = arith.constant dense<0.000000e+00> : vector<16x512xf32>
    %6 = tpu.matmul %0, %5, %cst_6 {dimension_numbers = #tpu.dot_dimension_numbers<[1], [0], [0], [1], [0, 0, 1, 1], [], []>} : vector<16x128xbf16>, vector<128x512xbf16>, vector<16x512xf32> -> vector<16x512xf32>
    %7 = arith.maximumf %3, %6 : vector<16x512xf32>
    %c2 = arith.constant 2 : index
    %c0_7 = arith.constant 0 : index
    %c0_8 = arith.constant 0 : index
    %8 = vector.load %arg1[%c2, %c0_7, %c0_8] : memref<4x128x512xbf16, #tpu.memory_space<vmem>>, vector<1x128x512xbf16>
    %9 = vector.shape_cast %8 : vector<1x128x512xbf16> to vector<128x512xbf16>
    %cst_9 = arith.constant dense<0.000000e+00> : vector<16x512xf32>
    %10 = tpu.matmul %0, %9, %cst_9 {dimension_numbers = #tpu.dot_dimension_numbers<[1], [0], [0], [1], [0, 0, 1, 1], [], []>} : vector<16x128xbf16>, vector<128x512xbf16>, vector<16x512xf32> -> vector<16x512xf32>
    %11 = arith.maximumf %7, %10 : vector<16x512xf32>
    %c3 = arith.constant 3 : index
    %c0_10 = arith.constant 0 : index
    %c0_11 = arith.constant 0 : index
    %12 = vector.load %arg1[%c3, %c0_10, %c0_11] : memref<4x128x512xbf16, #tpu.memory_space<vmem>>, vector<1x128x512xbf16>
    %13 = vector.shape_cast %12 : vector<1x128x512xbf16> to vector<128x512xbf16>
    %cst_12 = arith.constant dense<0.000000e+00> : vector<16x512xf32>
    %14 = tpu.matmul %0, %13, %cst_12 {dimension_numbers = #tpu.dot_dimension_numbers<[1], [0], [0], [1], [0, 0, 1, 1], [], []>} : vector<16x128xbf16>, vector<128x512xbf16>, vector<16x512xf32> -> vector<16x512xf32>
    %15 = arith.maximumf %11, %14 : vector<16x512xf32>
    %c0_13 = arith.constant 0 : index
    %c0_14 = arith.constant 0 : index
    %16 = vector.load %arg3[%c0_13, %c0_14] : memref<16x1xf32, #tpu.memory_space<vmem>>, vector<16x1xf32>
    %17 = vector.broadcast %16 : vector<16x1xf32> to vector<16x512xf32>
    %18 = arith.addf %15, %17 : vector<16x512xf32>
    %cst_15 = arith.constant 0.000000e+00 : f32
    %19 = vector.broadcast %cst_15 : f32 to vector<16x512xf32>
    %20 = arith.maximumf %18, %19 : vector<16x512xf32>
    %c0_16 = arith.constant 0 : index
    %c0_17 = arith.constant 0 : index
    %21 = vector.load %arg4[%c0_16, %c0_17] : memref<16x512xf32, #tpu.memory_space<vmem>>, vector<16x512xf32>
    tpu.vector_store %arg4[%c0_16, %c0_17], %20 {strides = array<i32>} : memref<16x512xf32, #tpu.memory_space<vmem>>, vector<16x512xf32>,
    return
  }
  func.func @transform_0(%arg0: i32) -> (i32, i32, i32) {
    %c0_i32 = arith.constant 0 : i32
    %c0_i32_0 = arith.constant 0 : i32
    %c0_i32_1 = arith.constant 0 : i32
    return %c0_i32, %c0_i32_0, %arg0 : i32, i32, i32
  }
  func.func @transform_1(%arg0: i32) -> (i32, i32) {
    %c0_i32 = arith.constant 0 : i32
    %c0_i32_0 = arith.constant 0 : i32
    %c0_i32_1 = arith.constant 0 : i32
    return %c0_i32, %c0_i32_0 : i32, i32
  }
  func.func @transform_2(%arg0: i32) -> (i32, i32) {
    %c0_i32 = arith.constant 0 : i32
    %c0_i32_0 = arith.constant 0 : i32
    %c0_i32_1 = arith.constant 0 : i32
    return %c0_i32, %c0_i32_0 : i32, i32
  }
  func.func @transform_3(%arg0: i32) -> (i32, i32) {
    %c0_i32 = arith.constant 0 : i32
    %c0_i32_0 = arith.constant 0 : i32
    return %c0_i32, %arg0 : i32, i32
  }
}

module attributes {stable_mosaic.version = 11 : i64} {
  func.func @_conv_pool_kernel(%arg0: i32, %arg1: memref<4x256x128xbf16, #tpu.memory_space<vmem>>, %arg2: memref<16x256xbf16, #tpu.memory_space<vmem>>, %arg3: memref<16x1xf32, #tpu.memory_space<vmem>>, %arg4: memref<16x128xf32, #tpu.memory_space<vmem>>) attributes {dimension_semantics = [#tpu.dimension_semantics<parallel>], iteration_bounds = array<i64: 1>, scalar_prefetch = 0 : i64, scratch_operands = 0 : i64, tpu.core_type = #tpu.core_type<tc>, window_params = [{transform_indices = @transform_0, window_bounds = array<i64: 4, 256, 128>}, {pipeline_mode = #tpu.pipeline_mode<synchronous>, transform_indices = @transform_1, window_bounds = array<i64: 16, 256>}, {pipeline_mode = #tpu.pipeline_mode<synchronous>, transform_indices = @transform_2, window_bounds = array<i64: 16, 1>}, {transform_indices = @transform_3, window_bounds = array<i64: 16, 128>}]} {
    %c0 = arith.constant 0 : index
    %c0_0 = arith.constant 0 : index
    %0 = vector.load %arg2[%c0, %c0_0] : memref<16x256xbf16, #tpu.memory_space<vmem>>, vector<16x256xbf16>
    %c0_1 = arith.constant 0 : index
    %c0_2 = arith.constant 0 : index
    %c0_3 = arith.constant 0 : index
    %1 = vector.load %arg1[%c0_1, %c0_2, %c0_3] : memref<4x256x128xbf16, #tpu.memory_space<vmem>>, vector<1x256x128xbf16>
    %2 = vector.shape_cast %1 : vector<1x256x128xbf16> to vector<256x128xbf16>
    %cst = arith.constant dense<0.000000e+00> : vector<16x128xf32>
    %3 = tpu.matmul %0, %2, %cst {dimension_numbers = #tpu.dot_dimension_numbers<[1], [0], [0], [1], [0, 0, 1, 1], [], []>} : vector<16x256xbf16>, vector<256x128xbf16>, vector<16x128xf32> -> vector<16x128xf32>
    %c1 = arith.constant 1 : index
    %c0_4 = arith.constant 0 : index
    %c0_5 = arith.constant 0 : index
    %4 = vector.load %arg1[%c1, %c0_4, %c0_5] : memref<4x256x128xbf16, #tpu.memory_space<vmem>>, vector<1x256x128xbf16>
    %5 = vector.shape_cast %4 : vector<1x256x128xbf16> to vector<256x128xbf16>
    %cst_6 = arith.constant dense<0.000000e+00> : vector<16x128xf32>
    %6 = tpu.matmul %0, %5, %cst_6 {dimension_numbers = #tpu.dot_dimension_numbers<[1], [0], [0], [1], [0, 0, 1, 1], [], []>} : vector<16x256xbf16>, vector<256x128xbf16>, vector<16x128xf32> -> vector<16x128xf32>
    %7 = arith.maximumf %3, %6 : vector<16x128xf32>
    %c2 = arith.constant 2 : index
    %c0_7 = arith.constant 0 : index
    %c0_8 = arith.constant 0 : index
    %8 = vector.load %arg1[%c2, %c0_7, %c0_8] : memref<4x256x128xbf16, #tpu.memory_space<vmem>>, vector<1x256x128xbf16>
    %9 = vector.shape_cast %8 : vector<1x256x128xbf16> to vector<256x128xbf16>
    %cst_9 = arith.constant dense<0.000000e+00> : vector<16x128xf32>
    %10 = tpu.matmul %0, %9, %cst_9 {dimension_numbers = #tpu.dot_dimension_numbers<[1], [0], [0], [1], [0, 0, 1, 1], [], []>} : vector<16x256xbf16>, vector<256x128xbf16>, vector<16x128xf32> -> vector<16x128xf32>
    %11 = arith.maximumf %7, %10 : vector<16x128xf32>
    %c3 = arith.constant 3 : index
    %c0_10 = arith.constant 0 : index
    %c0_11 = arith.constant 0 : index
    %12 = vector.load %arg1[%c3, %c0_10, %c0_11] : memref<4x256x128xbf16, #tpu.memory_space<vmem>>, vector<1x256x128xbf16>
    %13 = vector.shape_cast %12 : vector<1x256x128xbf16> to vector<256x128xbf16>
    %cst_12 = arith.constant dense<0.000000e+00> : vector<16x128xf32>
    %14 = tpu.matmul %0, %13, %cst_12 {dimension_numbers = #tpu.dot_dimension_numbers<[1], [0], [0], [1], [0, 0, 1, 1], [], []>} : vector<16x256xbf16>, vector<256x128xbf16>, vector<16x128xf32> -> vector<16x128xf32>
    %15 = arith.maximumf %11, %14 : vector<16x128xf32>
    %c0_13 = arith.constant 0 : index
    %c0_14 = arith.constant 0 : index
    %16 = vector.load %arg3[%c0_13, %c0_14] : memref<16x1xf32, #tpu.memory_space<vmem>>, vector<16x1xf32>
    %17 = vector.broadcast %16 : vector<16x1xf32> to vector<16x128xf32>
    %18 = arith.addf %15, %17 : vector<16x128xf32>
    %cst_15 = arith.constant 0.000000e+00 : f32
    %19 = vector.broadcast %cst_15 : f32 to vector<16x128xf32>
    %20 = arith.maximumf %18, %19 : vector<16x128xf32>
    %c0_16 = arith.constant 0 : index
    %c0_17 = arith.constant 0 : index
    %21 = vector.load %arg4[%c0_16, %c0_17] : memref<16x128xf32, #tpu.memory_space<vmem>>, vector<16x128xf32>
    tpu.vector_store %arg4[%c0_16, %c0_17], %20 {strides = array<i32>} : memref<16x128xf32, #tpu.memory_space<vmem>>, vector<16x128xf32>,
    return
  }
  func.func @transform_0(%arg0: i32) -> (i32, i32, i32) {
    %c0_i32 = arith.constant 0 : i32
    %c0_i32_0 = arith.constant 0 : i32
    %c0_i32_1 = arith.constant 0 : i32
    return %c0_i32, %c0_i32_0, %arg0 : i32, i32, i32
  }
  func.func @transform_1(%arg0: i32) -> (i32, i32) {
    %c0_i32 = arith.constant 0 : i32
    %c0_i32_0 = arith.constant 0 : i32
    %c0_i32_1 = arith.constant 0 : i32
    return %c0_i32, %c0_i32_0 : i32, i32
  }
  func.func @transform_2(%arg0: i32) -> (i32, i32) {
    %c0_i32 = arith.constant 0 : i32
    %c0_i32_0 = arith.constant 0 : i32
    %c0_i32_1 = arith.constant 0 : i32
    return %c0_i32, %c0_i32_0 : i32, i32
  }
  func.func @transform_3(%arg0: i32) -> (i32, i32) {
    %c0_i32 = arith.constant 0 : i32
    %c0_i32_0 = arith.constant 0 : i32
    return %c0_i32, %arg0 : i32, i32
  }
}

module attributes {stable_mosaic.version = 11 : i64} {
  func.func @_mlp_kernel(%arg0: i32, %arg1: memref<2x400xbf16, #tpu.memory_space<vmem>>, %arg2: memref<400x128xbf16, #tpu.memory_space<vmem>>, %arg3: memref<1x128xf32, #tpu.memory_space<vmem>>, %arg4: memref<128x128xbf16, #tpu.memory_space<vmem>>, %arg5: memref<1x128xf32, #tpu.memory_space<vmem>>, %arg6: memref<128x128xbf16, #tpu.memory_space<vmem>>, %arg7: memref<1x128xf32, #tpu.memory_space<vmem>>, %arg8: memref<2x128xf32, #tpu.memory_space<vmem>>) attributes {dimension_semantics = [#tpu.dimension_semantics<parallel>], iteration_bounds = array<i64: 1>, scalar_prefetch = 0 : i64, scratch_operands = 0 : i64, tpu.core_type = #tpu.core_type<tc>, window_params = [{transform_indices = @transform_0, window_bounds = array<i64: 2, 400>}, {pipeline_mode = #tpu.pipeline_mode<synchronous>, transform_indices = @transform_1, window_bounds = array<i64: 400, 128>}, {pipeline_mode = #tpu.pipeline_mode<synchronous>, transform_indices = @transform_2, window_bounds = array<i64: 1, 128>}, {pipeline_mode = #tpu.pipeline_mode<synchronous>, transform_indices = @transform_3, window_bounds = array<i64: 128, 128>}, {pipeline_mode = #tpu.pipeline_mode<synchronous>, transform_indices = @transform_4, window_bounds = array<i64: 1, 128>}, {pipeline_mode = #tpu.pipeline_mode<synchronous>, transform_indices = @transform_5, window_bounds = array<i64: 128, 128>}, {pipeline_mode = #tpu.pipeline_mode<synchronous>, transform_indices = @transform_6, window_bounds = array<i64: 1, 128>}, {transform_indices = @transform_7, window_bounds = array<i64: 2, 128>}]} {
    %c0 = arith.constant 0 : index
    %c0_0 = arith.constant 0 : index
    %0 = vector.load %arg1[%c0, %c0_0] : memref<2x400xbf16, #tpu.memory_space<vmem>>, vector<2x400xbf16>
    %c0_1 = arith.constant 0 : index
    %c0_2 = arith.constant 0 : index
    %1 = vector.load %arg2[%c0_1, %c0_2] : memref<400x128xbf16, #tpu.memory_space<vmem>>, vector<400x128xbf16>
    %cst = arith.constant dense<0.000000e+00> : vector<2x128xf32>
    %2 = tpu.matmul %0, %1, %cst {dimension_numbers = #tpu.dot_dimension_numbers<[1], [0], [0], [1], [0, 0, 1, 1], [], []>} : vector<2x400xbf16>, vector<400x128xbf16>, vector<2x128xf32> -> vector<2x128xf32>
    %c0_3 = arith.constant 0 : index
    %c0_4 = arith.constant 0 : index
    %3 = vector.load %arg3[%c0_3, %c0_4] : memref<1x128xf32, #tpu.memory_space<vmem>>, vector<1x128xf32>
    %4 = vector.broadcast %3 : vector<1x128xf32> to vector<2x128xf32>
    %5 = arith.addf %2, %4 : vector<2x128xf32>
    %cst_5 = arith.constant 0.000000e+00 : f32
    %6 = vector.broadcast %cst_5 : f32 to vector<2x128xf32>
    %7 = arith.maximumf %5, %6 : vector<2x128xf32>
    %8 = arith.truncf %7 : vector<2x128xf32> to vector<2x128xbf16>
    %c0_6 = arith.constant 0 : index
    %c0_7 = arith.constant 0 : index
    %9 = vector.load %arg4[%c0_6, %c0_7] : memref<128x128xbf16, #tpu.memory_space<vmem>>, vector<128x128xbf16>
    %cst_8 = arith.constant dense<0.000000e+00> : vector<2x128xf32>
    %10 = tpu.matmul %8, %9, %cst_8 {dimension_numbers = #tpu.dot_dimension_numbers<[1], [0], [0], [1], [0, 0, 1, 1], [], []>} : vector<2x128xbf16>, vector<128x128xbf16>, vector<2x128xf32> -> vector<2x128xf32>
    %c0_9 = arith.constant 0 : index
    %c0_10 = arith.constant 0 : index
    %11 = vector.load %arg5[%c0_9, %c0_10] : memref<1x128xf32, #tpu.memory_space<vmem>>, vector<1x128xf32>
    %12 = vector.broadcast %11 : vector<1x128xf32> to vector<2x128xf32>
    %13 = arith.addf %10, %12 : vector<2x128xf32>
    %cst_11 = arith.constant 0.000000e+00 : f32
    %14 = vector.broadcast %cst_11 : f32 to vector<2x128xf32>
    %15 = arith.maximumf %13, %14 : vector<2x128xf32>
    %16 = arith.truncf %15 : vector<2x128xf32> to vector<2x128xbf16>
    %c0_12 = arith.constant 0 : index
    %c0_13 = arith.constant 0 : index
    %17 = vector.load %arg6[%c0_12, %c0_13] : memref<128x128xbf16, #tpu.memory_space<vmem>>, vector<128x128xbf16>
    %cst_14 = arith.constant dense<0.000000e+00> : vector<2x128xf32>
    %18 = tpu.matmul %16, %17, %cst_14 {dimension_numbers = #tpu.dot_dimension_numbers<[1], [0], [0], [1], [0, 0, 1, 1], [], []>} : vector<2x128xbf16>, vector<128x128xbf16>, vector<2x128xf32> -> vector<2x128xf32>
    %c0_15 = arith.constant 0 : index
    %c0_16 = arith.constant 0 : index
    %19 = vector.load %arg7[%c0_15, %c0_16] : memref<1x128xf32, #tpu.memory_space<vmem>>, vector<1x128xf32>
    %20 = vector.broadcast %19 : vector<1x128xf32> to vector<2x128xf32>
    %21 = arith.addf %18, %20 : vector<2x128xf32>
    %c0_17 = arith.constant 0 : index
    %c0_18 = arith.constant 0 : index
    %22 = vector.load %arg8[%c0_17, %c0_18] : memref<2x128xf32, #tpu.memory_space<vmem>>, vector<2x128xf32>
    tpu.vector_store %arg8[%c0_17, %c0_18], %21 {strides = array<i32>} : memref<2x128xf32, #tpu.memory_space<vmem>>, vector<2x128xf32>,
    return
  }
  func.func @transform_0(%arg0: i32) -> (i32, i32) {
    %c0_i32 = arith.constant 0 : i32
    %c0_i32_0 = arith.constant 0 : i32
    return %arg0, %c0_i32 : i32, i32
  }
  func.func @transform_1(%arg0: i32) -> (i32, i32) {
    %c0_i32 = arith.constant 0 : i32
    %c0_i32_0 = arith.constant 0 : i32
    %c0_i32_1 = arith.constant 0 : i32
    return %c0_i32, %c0_i32_0 : i32, i32
  }
  func.func @transform_2(%arg0: i32) -> (i32, i32) {
    %c0_i32 = arith.constant 0 : i32
    %c0_i32_0 = arith.constant 0 : i32
    %c0_i32_1 = arith.constant 0 : i32
    return %c0_i32, %c0_i32_0 : i32, i32
  }
  func.func @transform_3(%arg0: i32) -> (i32, i32) {
    %c0_i32 = arith.constant 0 : i32
    %c0_i32_0 = arith.constant 0 : i32
    %c0_i32_1 = arith.constant 0 : i32
    return %c0_i32, %c0_i32_0 : i32, i32
  }
  func.func @transform_4(%arg0: i32) -> (i32, i32) {
    %c0_i32 = arith.constant 0 : i32
    %c0_i32_0 = arith.constant 0 : i32
    %c0_i32_1 = arith.constant 0 : i32
    return %c0_i32, %c0_i32_0 : i32, i32
  }
  func.func @transform_5(%arg0: i32) -> (i32, i32) {
    %c0_i32 = arith.constant 0 : i32
    %c0_i32_0 = arith.constant 0 : i32
    %c0_i32_1 = arith.constant 0 : i32
    return %c0_i32, %c0_i32_0 : i32, i32
  }
  func.func @transform_6(%arg0: i32) -> (i32, i32) {
    %c0_i32 = arith.constant 0 : i32
    %c0_i32_0 = arith.constant 0 : i32
    %c0_i32_1 = arith.constant 0 : i32
    return %c0_i32, %c0_i32_0 : i32, i32
  }
  func.func @transform_7(%arg0: i32) -> (i32, i32) {
    %c0_i32 = arith.constant 0 : i32
    %c0_i32_0 = arith.constant 0 : i32
    return %arg0, %c0_i32 : i32, i32
  }
}

</mosaic_0001>

<llo_original>
// kernel: net_forward.3
$region0: #{net_forward.3}
  #allocation0 [shape = 'u32[]', space=smem, size = 0x4, offset = 0x4, fixed_abs, tag = 'smem constant byte address 0x4 - core index']
  #allocation1 [shape = 'u32[144,128]{1,0:T(1,128)}', space=vmem, size = 0x12000, scoped, tag = 'internal scratch']
  %s0 = inlined_call_operand.vmem [shape: bf16[4,128,512], index: 0, kind: input, shape index: {}]
  %s1 = inlined_call_operand.vmem [shape: bf16[16,128], index: 1, kind: input, shape index: {}]
  %s2 = inlined_call_operand.vmem [shape: f32[16,1], index: 2, kind: input, shape index: {}]
  %s3 = inlined_call_operand.vmem [shape: f32[16,512], index: 3, kind: output, shape index: {}]
  %s4 = sld [smem:[#allocation0]]
  $region22: #{net_forward.3} parent=0
    _
  %s6 = ssub.s32 1, %s4
  %s7 = scalar_select 0, %s6, %s4
  // Predicated region
  $region2: #{net_forward.3} parent=0 // pred_check
    _
  $region3: #{net_forward.3} parent=0 // pred_check_branch
    %9 = sbr.rel (0) target = $region5
  $region4: #{net_forward.3} parent=0 // pred_region
    _
  $region5: #{net_forward.3} parent=0 // pred_fallthru
    _
  // Predicated region
  $region6: #{net_forward.3} parent=0 // pred_check
    _
  $region7: #{net_forward.3} parent=0 // pred_check_branch
    %11 = sbr.rel (0) target = $region9
  $region8: #{net_forward.3} parent=0 // pred_region
    _
  $region9: #{net_forward.3} parent=0 // pred_fallthru
    _
  // Predicated region
  $region10: #{net_forward.3} parent=0 // pred_check
    _
  $region11: #{net_forward.3} parent=0 // pred_check_branch
    %13 = sbr.rel (0) target = $region13
  $region12: #{net_forward.3} parent=0 // pred_region
    _
  $region13: #{net_forward.3} parent=0 // pred_fallthru
    _
  %v15 = vld [vmem:[%s1] sm:$0xf]
  %v16 = vld [vmem:[%s1 + $0x4] sm:$0xf]
  %v17 = vld [vmem:[%s0] sm:$0xff]
  %v18 = vld [vmem:[%s0 + $0x8] sm:$0xff]
  %v19 = vld [vmem:[%s0 + $0x10] sm:$0xff]
  %v20 = vld [vmem:[%s0 + $0x18] sm:$0xff]
  %v21 = vld [vmem:[%s0 + $0x20] sm:$0xff]
  %v22 = vld [vmem:[%s0 + $0x28] sm:$0xff]
  %v23 = vld [vmem:[%s0 + $0x30] sm:$0xff]
  %v24 = vld [vmem:[%s0 + $0x38] sm:$0xff]
  %v25 = vld [vmem:[%s0 + $0x40] sm:$0xff]
  %v26 = vld [vmem:[%s0 + $0x48] sm:$0xff]
  %v27 = vld [vmem:[%s0 + $0x50] sm:$0xff]
  %v28 = vld [vmem:[%s0 + $0x58] sm:$0xff]
  %v29 = vld [vmem:[%s0 + $0x60] sm:$0xff]
  %v30 = vld [vmem:[%s0 + $0x68] sm:$0xff]
  %v31 = vld [vmem:[%s0 + $0x70] sm:$0xff]
  %v32 = vld [vmem:[%s0 + $0x78] sm:$0xff]
  %v33 = vld [vmem:[%s0 + $0x80] sm:$0xff]
  %v34 = vld [vmem:[%s0 + $0x88] sm:$0xff]
  %v35 = vld [vmem:[%s0 + $0x90] sm:$0xff]
  %v36 = vld [vmem:[%s0 + $0x98] sm:$0xff]
  %v37 = vld [vmem:[%s0 + $0xa0] sm:$0xff]
  %v38 = vld [vmem:[%s0 + $0xa8] sm:$0xff]
  %v39 = vld [vmem:[%s0 + $0xb0] sm:$0xff]
  %v40 = vld [vmem:[%s0 + $0xb8] sm:$0xff]
  %v41 = vld [vmem:[%s0 + $0xc0] sm:$0xff]
  %v42 = vld [vmem:[%s0 + $0xc8] sm:$0xff]
  %v43 = vld [vmem:[%s0 + $0xd0] sm:$0xff]
  %v44 = vld [vmem:[%s0 + $0xd8] sm:$0xff]
  %v45 = vld [vmem:[%s0 + $0xe0] sm:$0xff]
  %v46 = vld [vmem:[%s0 + $0xe8] sm:$0xff]
  %v47 = vld [vmem:[%s0 + $0xf0] sm:$0xff]
  %v48 = vld [vmem:[%s0 + $0xf8] sm:$0xff]
  %v51 = vunpack.c.l.b16 %v15
  %v52 = vunpack.c.l.b16 %v16
  %v53 = vpack.c.b16 %v52, %v51
  %v87 = vunpack.c.l.b16 %v17
  %v88 = vunpack.c.h.b16 %v17
  %v89 = vunpack.c.l.b16 %v18
  %v90 = vunpack.c.h.b16 %v18
  %v91 = vunpack.c.l.b16 %v19
  %v92 = vunpack.c.h.b16 %v19
  %v93 = vunpack.c.l.b16 %v20
  %v94 = vunpack.c.h.b16 %v20
  %v95 = vunpack.c.l.b16 %v21
  %v96 = vunpack.c.h.b16 %v21
  %v97 = vunpack.c.l.b16 %v22
  %v98 = vunpack.c.h.b16 %v22
  %v99 = vunpack.c.l.b16 %v23
  %v100 = vunpack.c.h.b16 %v23
  %v101 = vunpack.c.l.b16 %v24
  %v102 = vunpack.c.h.b16 %v24
  %v103 = vunpack.c.l.b16 %v25
  %v104 = vunpack.c.h.b16 %v25
  %v105 = vunpack.c.l.b16 %v26
  %v106 = vunpack.c.h.b16 %v26
  %v107 = vunpack.c.l.b16 %v27
  %v108 = vunpack.c.h.b16 %v27
  %v109 = vunpack.c.l.b16 %v28
  %v110 = vunpack.c.h.b16 %v28
  %v111 = vunpack.c.l.b16 %v29
  %v112 = vunpack.c.h.b16 %v29
  %v113 = vunpack.c.l.b16 %v30
  %v114 = vunpack.c.h.b16 %v30
  %v115 = vunpack.c.l.b16 %v31
  %v116 = vunpack.c.h.b16 %v31
  %v117 = vunpack.c.l.b16 %v32
  %v118 = vunpack.c.h.b16 %v32
  %v119 = vunpack.c.l.b16 %v33
  %v120 = vunpack.c.h.b16 %v33
  %v121 = vunpack.c.l.b16 %v34
  %v122 = vunpack.c.h.b16 %v34
  %v123 = vunpack.c.l.b16 %v35
  %v124 = vunpack.c.h.b16 %v35
  %v125 = vunpack.c.l.b16 %v36
  %v126 = vunpack.c.h.b16 %v36
  %v127 = vunpack.c.l.b16 %v37
  %v128 = vunpack.c.h.b16 %v37
  %v129 = vunpack.c.l.b16 %v38
  %v130 = vunpack.c.h.b16 %v38
  %v131 = vunpack.c.l.b16 %v39
  %v132 = vunpack.c.h.b16 %v39
  %v133 = vunpack.c.l.b16 %v40
  %v134 = vunpack.c.h.b16 %v40
  %v135 = vunpack.c.l.b16 %v41
  %v136 = vunpack.c.h.b16 %v41
  %v137 = vunpack.c.l.b16 %v42
  %v138 = vunpack.c.h.b16 %v42
  %v139 = vunpack.c.l.b16 %v43
  %v140 = vunpack.c.h.b16 %v43
  %v141 = vunpack.c.l.b16 %v44
  %v142 = vunpack.c.h.b16 %v44
  %v143 = vunpack.c.l.b16 %v45
  %v144 = vunpack.c.h.b16 %v45
  %v145 = vunpack.c.l.b16 %v46
  %v146 = vunpack.c.h.b16 %v46
  %v147 = vunpack.c.l.b16 %v47
  %v148 = vunpack.c.h.b16 %v47
  %v149 = vunpack.c.l.b16 %v48
  %v150 = vunpack.c.h.b16 %v48
  %v151 = vpack.c.b16 %v91, %v87
  %v152 = vpack.c.b16 %v92, %v88
  %v153 = vpack.c.b16 %v93, %v89
  %v154 = vpack.c.b16 %v94, %v90
  %v155 = vpack.c.b16 %v99, %v95
  %v156 = vpack.c.b16 %v100, %v96
  %v157 = vpack.c.b16 %v101, %v97
  %v158 = vpack.c.b16 %v102, %v98
  %v159 = vpack.c.b16 %v107, %v103
  %v160 = vpack.c.b16 %v108, %v104
  %v161 = vpack.c.b16 %v109, %v105
  %v162 = vpack.c.b16 %v110, %v106
  %v163 = vpack.c.b16 %v115, %v111
  %v164 = vpack.c.b16 %v116, %v112
  %v165 = vpack.c.b16 %v117, %v113
  %v166 = vpack.c.b16 %v118, %v114
  %v167 = vpack.c.b16 %v123, %v119
  %v168 = vpack.c.b16 %v124, %v120
  %v169 = vpack.c.b16 %v125, %v121
  %v170 = vpack.c.b16 %v126, %v122
  %v171 = vpack.c.b16 %v131, %v127
  %v172 = vpack.c.b16 %v132, %v128
  %v173 = vpack.c.b16 %v133, %v129
  %v174 = vpack.c.b16 %v134, %v130
  %v175 = vpack.c.b16 %v139, %v135
  %v176 = vpack.c.b16 %v140, %v136
  %v177 = vpack.c.b16 %v141, %v137
  %v178 = vpack.c.b16 %v142, %v138
  %v179 = vpack.c.b16 %v147, %v143
  %v180 = vpack.c.b16 %v148, %v144
  %v181 = vpack.c.b16 %v149, %v145
  %v182 = vpack.c.b16 %v150, %v146
  %215 = vmatprep.subr.bf16.mxu0 %v152
  %216 = vmatpush1.bf16.msra.mxu0 %v151
  %217 = vmatprep.subr.bf16.mxu0 %v156
  %218 = vmatpush1.bf16.msra.mxu0 %v155
  %219 = vmatprep.subr.bf16.mxu0 %v160
  %220 = vmatpush1.bf16.msra.mxu0 %v159
  %221 = vmatprep.subr.bf16.mxu0 %v164
  %222 = vmatpush1.bf16.msra.mxu0 %v163
  %223 = vmatprep.subr.bf16.mxu0 %v168
  %224 = vmatpush1.bf16.msra.mxu0 %v167
  %225 = vmatprep.subr.bf16.mxu0 %v172
  %226 = vmatpush1.bf16.msra.mxu0 %v171
  %227 = vmatprep.subr.bf16.mxu0 %v176
  %228 = vmatpush1.bf16.msra.mxu0 %v175
  %229 = vmatprep.subr.bf16.mxu0 %v180
  %230 = vmatpush1.bf16.msra.mxu0 %v179
  %231 = vmatprep.subr.bf16.mxu0 0
  %232 = vmatpush1.bf16.msra.mxu0 0
  %233 = vmatprep.subr.bf16.mxu0 0
  %234 = vmatpush1.bf16.msra.mxu0 0
  %235 = vmatprep.subr.bf16.mxu0 0
  %236 = vmatpush1.bf16.msra.mxu0 0
  %237 = vmatprep.subr.bf16.mxu0 0
  %238 = vmatpush1.bf16.msra.mxu0 0
  %239 = vmatprep.subr.bf16.mxu0 0
  %240 = vmatpush1.bf16.msra.mxu0 0
  %241 = vmatprep.subr.bf16.mxu0 0
  %242 = vmatpush1.bf16.msra.mxu0 0
  %243 = vmatprep.subr.bf16.mxu0 0
  %244 = vmatpush1.bf16.msra.mxu0 0
  %245 = vmatprep.subr.bf16.mxu0 0
  %246 = vmatpush1.bf16.msra.mxu0 0
  %247 = vmatprep.mubr.bf16.mxu0 0
  %248 = vmatmul.mubr.bf16.gmra.mrb[0].mxu0 %v53
  %v249 = vpop.f32.mrb[0].mxu0
  %v250 = vadd.f32 0.0, %v249
  %v251 = vpop.f32.mrb[0].mxu0
  %v252 = vadd.f32 0.0, %v251
  %v253 = vpop.f32.mrb[0].mxu0
  %v254 = vadd.f32 0.0, %v253
  %v255 = vpop.f32.mrb[0].mxu0
  %v256 = vadd.f32 0.0, %v255
  %257 = vdwg.mxu0
  %258 = vmatprep.subr.bf16.mxu0 %v154
  %259 = vmatpush1.bf16.msra.mxu0 %v153
  %260 = vmatprep.subr.bf16.mxu0 %v158
  %261 = vmatpush1.bf16.msra.mxu0 %v157
  %262 = vmatprep.subr.bf16.mxu0 %v162
  %263 = vmatpush1.bf16.msra.mxu0 %v161
  %264 = vmatprep.subr.bf16.mxu0 %v166
  %265 = vmatpush1.bf16.msra.mxu0 %v165
  %266 = vmatprep.subr.bf16.mxu0 %v170
  %267 = vmatpush1.bf16.msra.mxu0 %v169
  %268 = vmatprep.subr.bf16.mxu0 %v174
  %269 = vmatpush1.bf16.msra.mxu0 %v173
  %270 = vmatprep.subr.bf16.mxu0 %v178
  %271 = vmatpush1.bf16.msra.mxu0 %v177
  %272 = vmatprep.subr.bf16.mxu0 %v182
  %273 = vmatpush1.bf16.msra.mxu0 %v181
  %274 = vmatprep.subr.bf16.mxu0 0
  %275 = vmatpush1.bf16.msra.mxu0 0
  %276 = vmatprep.subr.bf16.mxu0 0
  %277 = vmatpush1.bf16.msra.mxu0 0
  %278 = vmatprep.subr.bf16.mxu0 0
  %279 = vmatpush1.bf16.msra.mxu0 0
  %280 = vmatprep.subr.bf16.mxu0 0
  %281 = vmatpush1.bf16.msra.mxu0 0
  %282 = vmatprep.subr.bf16.mxu0 0
  %283 = vmatpush1.bf16.msra.mxu0 0
  %284 = vmatprep.subr.bf16.mxu0 0
  %285 = vmatpush1.bf16.msra.mxu0 0
  %286 = vmatprep.subr.bf16.mxu0 0
  %287 = vmatpush1.bf16.msra.mxu0 0
  %288 = vmatprep.subr.bf16.mxu0 0
  %289 = vmatpush1.bf16.msra.mxu0 0
  %290 = vmatprep.mubr.bf16.mxu0 0
  %291 = vmatmul.mubr.bf16.gmra.mrb[0].mxu0 %v53
  %v292 = vpop.f32.mrb[0].mxu0
  %v293 = vadd.f32 0.0, %v292
  %v294 = vpop.f32.mrb[0].mxu0
  %v295 = vadd.f32 0.0, %v294
  %v296 = vpop.f32.mrb[0].mxu0
  %v297 = vadd.f32 0.0, %v296
  %v298 = vpop.f32.mrb[0].mxu0
  %v299 = vadd.f32 0.0, %v298
  %300 = vdwg.mxu0
  %s301 = scalar_lea.vmem %s0, 256
  %v302 = vld [vmem:[%s301] sm:$0xff]
  %v303 = vld [vmem:[%s301 + $0x8] sm:$0xff]
  %v304 = vld [vmem:[%s301 + $0x10] sm:$0xff]
  %v305 = vld [vmem:[%s301 + $0x18] sm:$0xff]
  %v306 = vld [vmem:[%s301 + $0x20] sm:$0xff]
  %v307 = vld [vmem:[%s301 + $0x28] sm:$0xff]
  %v308 = vld [vmem:[%s301 + $0x30] sm:$0xff]
  %v309 = vld [vmem:[%s301 + $0x38] sm:$0xff]
  %v310 = vld [vmem:[%s301 + $0x40] sm:$0xff]
  %v311 = vld [vmem:[%s301 + $0x48] sm:$0xff]
  %v312 = vld [vmem:[%s301 + $0x50] sm:$0xff]
  %v313 = vld [vmem:[%s301 + $0x58] sm:$0xff]
  %v314 = vld [vmem:[%s301 + $0x60] sm:$0xff]
  %v315 = vld [vmem:[%s301 + $0x68] sm:$0xff]
  %v316 = vld [vmem:[%s301 + $0x70] sm:$0xff]
  %v317 = vld [vmem:[%s301 + $0x78] sm:$0xff]
  %v318 = vld [vmem:[%s301 + $0x80] sm:$0xff]
  %v319 = vld [vmem:[%s301 + $0x88] sm:$0xff]
  %v320 = vld [vmem:[%s301 + $0x90] sm:$0xff]
  %v321 = vld [vmem:[%s301 + $0x98] sm:$0xff]
  %v322 = vld [vmem:[%s301 + $0xa0] sm:$0xff]
  %v323 = vld [vmem:[%s301 + $0xa8] sm:$0xff]
  %v324 = vld [vmem:[%s301 + $0xb0] sm:$0xff]
  %v325 = vld [vmem:[%s301 + $0xb8] sm:$0xff]
  %v326 = vld [vmem:[%s301 + $0xc0] sm:$0xff]
  %v327 = vld [vmem:[%s301 + $0xc8] sm:$0xff]
  %v328 = vld [vmem:[%s301 + $0xd0] sm:$0xff]
  %v329 = vld [vmem:[%s301 + $0xd8] sm:$0xff]
  %v330 = vld [vmem:[%s301 + $0xe0] sm:$0xff]
  %v331 = vld [vmem:[%s301 + $0xe8] sm:$0xff]
  %v332 = vld [vmem:[%s301 + $0xf0] sm:$0xff]
  %v333 = vld [vmem:[%s301 + $0xf8] sm:$0xff]
  %v366 = vunpack.c.l.b16 %v302
  %v367 = vunpack.c.h.b16 %v302
  %v368 = vunpack.c.l.b16 %v303
  %v369 = vunpack.c.h.b16 %v303
  %v370 = vunpack.c.l.b16 %v304
  %v371 = vunpack.c.h.b16 %v304
  %v372 = vunpack.c.l.b16 %v305
  %v373 = vunpack.c.h.b16 %v305
  %v374 = vunpack.c.l.b16 %v306
  %v375 = vunpack.c.h.b16 %v306
  %v376 = vunpack.c.l.b16 %v307
  %v377 = vunpack.c.h.b16 %v307
  %v378 = vunpack.c.l.b16 %v308
  %v379 = vunpack.c.h.b16 %v308
  %v380 = vunpack.c.l.b16 %v309
  %v381 = vunpack.c.h.b16 %v309
  %v382 = vunpack.c.l.b16 %v310
  %v383 = vunpack.c.h.b16 %v310
  %v384 = vunpack.c.l.b16 %v311
  %v385 = vunpack.c.h.b16 %v311
  %v386 = vunpack.c.l.b16 %v312
  %v387 = vunpack.c.h.b16 %v312
  %v388 = vunpack.c.l.b16 %v313
  %v389 = vunpack.c.h.b16 %v313
  %v390 = vunpack.c.l.b16 %v314
  %v391 = vunpack.c.h.b16 %v314
  %v392 = vunpack.c.l.b16 %v315
  %v393 = vunpack.c.h.b16 %v315
  %v394 = vunpack.c.l.b16 %v316
  %v395 = vunpack.c.h.b16 %v316
  %v396 = vunpack.c.l.b16 %v317
  %v397 = vunpack.c.h.b16 %v317
  %v398 = vunpack.c.l.b16 %v318
  %v399 = vunpack.c.h.b16 %v318
  %v400 = vunpack.c.l.b16 %v319
  %v401 = vunpack.c.h.b16 %v319
  %v402 = vunpack.c.l.b16 %v320
  %v403 = vunpack.c.h.b16 %v320
  %v404 = vunpack.c.l.b16 %v321
  %v405 = vunpack.c.h.b16 %v321
  %v406 = vunpack.c.l.b16 %v322
  %v407 = vunpack.c.h.b16 %v322
  %v408 = vunpack.c.l.b16 %v323
  %v409 = vunpack.c.h.b16 %v323
  %v410 = vunpack.c.l.b16 %v324
  %v411 = vunpack.c.h.b16 %v324
  %v412 = vunpack.c.l.b16 %v325
  %v413 = vunpack.c.h.b16 %v325
  %v414 = vunpack.c.l.b16 %v326
  %v415 = vunpack.c.h.b16 %v326
  %v416 = vunpack.c.l.b16 %v327
  %v417 = vunpack.c.h.b16 %v327
  %v418 = vunpack.c.l.b16 %v328
  %v419 = vunpack.c.h.b16 %v328
  %v420 = vunpack.c.l.b16 %v329
  %v421 = vunpack.c.h.b16 %v329
  %v422 = vunpack.c.l.b16 %v330
  %v423 = vunpack.c.h.b16 %v330
  %v424 = vunpack.c.l.b16 %v331
  %v425 = vunpack.c.h.b16 %v331
  %v426 = vunpack.c.l.b16 %v332
  %v427 = vunpack.c.h.b16 %v332
  %v428 = vunpack.c.l.b16 %v333
  %v429 = vunpack.c.h.b16 %v333
  %v430 = vpack.c.b16 %v370, %v366
  %v431 = vpack.c.b16 %v371, %v367
  %v432 = vpack.c.b16 %v372, %v368
  %v433 = vpack.c.b16 %v373, %v369
  %v434 = vpack.c.b16 %v378, %v374
  %v435 = vpack.c.b16 %v379, %v375
  %v436 = vpack.c.b16 %v380, %v376
  %v437 = vpack.c.b16 %v381, %v377
  %v438 = vpack.c.b16 %v386, %v382
  %v439 = vpack.c.b16 %v387, %v383
  %v440 = vpack.c.b16 %v388, %v384
  %v441 = vpack.c.b16 %v389, %v385
  %v442 = vpack.c.b16 %v394, %v390
  %v443 = vpack.c.b16 %v395, %v391
  %v444 = vpack.c.b16 %v396, %v392
  %v445 = vpack.c.b16 %v397, %v393
  %v446 = vpack.c.b16 %v402, %v398
  %v447 = vpack.c.b16 %v403, %v399
  %v448 = vpack.c.b16 %v404, %v400
  %v449 = vpack.c.b16 %v405, %v401
  %v450 = vpack.c.b16 %v410, %v406
  %v451 = vpack.c.b16 %v411, %v407
  %v452 = vpack.c.b16 %v412, %v408
  %v453 = vpack.c.b16 %v413, %v409
  %v454 = vpack.c.b16 %v418, %v414
  %v455 = vpack.c.b16 %v419, %v415
  %v456 = vpack.c.b16 %v420, %v416
  %v457 = vpack.c.b16 %v421, %v417
  %v458 = vpack.c.b16 %v426, %v422
  %v459 = vpack.c.b16 %v427, %v423
  %v460 = vpack.c.b16 %v428, %v424
  %v461 = vpack.c.b16 %v429, %v425
  %494 = vmatprep.subr.bf16.mxu0 %v431
  %495 = vmatpush1.bf16.msra.mxu0 %v430
  %496 = vmatprep.subr.bf16.mxu0 %v435
  %497 = vmatpush1.bf16.msra.mxu0 %v434
  %498 = vmatprep.subr.bf16.mxu0 %v439
  %499 = vmatpush1.bf16.msra.mxu0 %v438
  %500 = vmatprep.subr.bf16.mxu0 %v443
  %501 = vmatpush1.bf16.msra.mxu0 %v442
  %502 = vmatprep.subr.bf16.mxu0 %v447
  %503 = vmatpush1.bf16.msra.mxu0 %v446
  %504 = vmatprep.subr.bf16.mxu0 %v451
  %505 = vmatpush1.bf16.msra.mxu0 %v450
  %506 = vmatprep.subr.bf16.mxu0 %v455
  %507 = vmatpush1.bf16.msra.mxu0 %v454
  %508 = vmatprep.subr.bf16.mxu0 %v459
  %509 = vmatpush1.bf16.msra.mxu0 %v458
  %510 = vmatprep.subr.bf16.mxu0 0
  %511 = vmatpush1.bf16.msra.mxu0 0
  %512 = vmatprep.subr.bf16.mxu0 0
  %513 = vmatpush1.bf16.msra.mxu0 0
  %514 = vmatprep.subr.bf16.mxu0 0
  %515 = vmatpush1.bf16.msra.mxu0 0
  %516 = vmatprep.subr.bf16.mxu0 0
  %517 = vmatpush1.bf16.msra.mxu0 0
  %518 = vmatprep.subr.bf16.mxu0 0
  %519 = vmatpush1.bf16.msra.mxu0 0
  %520 = vmatprep.subr.bf16.mxu0 0
  %521 = vmatpush1.bf16.msra.mxu0 0
  %522 = vmatprep.subr.bf16.mxu0 0
  %523 = vmatpush1.bf16.msra.mxu0 0
  %524 = vmatprep.subr.bf16.mxu0 0
  %525 = vmatpush1.bf16.msra.mxu0 0
  %526 = vmatprep.mubr.bf16.mxu0 0
  %527 = vmatmul.mubr.bf16.gmra.mrb[0].mxu0 %v53
  %v528 = vpop.f32.mrb[0].mxu0
  %v529 = vadd.f32 0.0, %v528
  %v530 = vpop.f32.mrb[0].mxu0
  %v531 = vadd.f32 0.0, %v530
  %v532 = vpop.f32.mrb[0].mxu0
  %v533 = vadd.f32 0.0, %v532
  %v534 = vpop.f32.mrb[0].mxu0
  %v535 = vadd.f32 0.0, %v534
  %536 = vdwg.mxu0
  %537 = vmatprep.subr.bf16.mxu0 %v433
  %538 = vmatpush1.bf16.msra.mxu0 %v432
  %539 = vmatprep.subr.bf16.mxu0 %v437
  %540 = vmatpush1.bf16.msra.mxu0 %v436
  %541 = vmatprep.subr.bf16.mxu0 %v441
  %542 = vmatpush1.bf16.msra.mxu0 %v440
  %543 = vmatprep.subr.bf16.mxu0 %v445
  %544 = vmatpush1.bf16.msra.mxu0 %v444
  %545 = vmatprep.subr.bf16.mxu0 %v449
  %546 = vmatpush1.bf16.msra.mxu0 %v448
  %547 = vmatprep.subr.bf16.mxu0 %v453
  %548 = vmatpush1.bf16.msra.mxu0 %v452
  %549 = vmatprep.subr.bf16.mxu0 %v457
  %550 = vmatpush1.bf16.msra.mxu0 %v456
  %551 = vmatprep.subr.bf16.mxu0 %v461
  %552 = vmatpush1.bf16.msra.mxu0 %v460
  %553 = vmatprep.subr.bf16.mxu0 0
  %554 = vmatpush1.bf16.msra.mxu0 0
  %555 = vmatprep.subr.bf16.mxu0 0
  %556 = vmatpush1.bf16.msra.mxu0 0
  %557 = vmatprep.subr.bf16.mxu0 0
  %558 = vmatpush1.bf16.msra.mxu0 0
  %559 = vmatprep.subr.bf16.mxu0 0
  %560 = vmatpush1.bf16.msra.mxu0 0
  %561 = vmatprep.subr.bf16.mxu0 0
  %562 = vmatpush1.bf16.msra.mxu0 0
  %563 = vmatprep.subr.bf16.mxu0 0
  %564 = vmatpush1.bf16.msra.mxu0 0
  %565 = vmatprep.subr.bf16.mxu0 0
  %566 = vmatpush1.bf16.msra.mxu0 0
  %567 = vmatprep.subr.bf16.mxu0 0
  %568 = vmatpush1.bf16.msra.mxu0 0
  %569 = vmatprep.mubr.bf16.mxu0 0
  %570 = vmatmul.mubr.bf16.gmra.mrb[0].mxu0 %v53
  %v571 = vpop.f32.mrb[0].mxu0
  %v572 = vadd.f32 0.0, %v571
  %v573 = vpop.f32.mrb[0].mxu0
  %v574 = vadd.f32 0.0, %v573
  %v575 = vpop.f32.mrb[0].mxu0
  %v576 = vadd.f32 0.0, %v575
  %v577 = vpop.f32.mrb[0].mxu0
  %v578 = vadd.f32 0.0, %v577
  %579 = vdwg.mxu0
  %v580 = vmax.f32 %v250, %v529
  %v581 = vmax.f32 %v252, %v531
  %v582 = vmax.f32 %v293, %v572
  %v583 = vmax.f32 %v295, %v574
  %v584 = vmax.f32 %v254, %v533
  %v585 = vmax.f32 %v256, %v535
  %v586 = vmax.f32 %v297, %v576
  %v587 = vmax.f32 %v299, %v578
  %s588 = scalar_lea.vmem %s0, 512
  %v589 = vld [vmem:[%s588] sm:$0xff]
  %v590 = vld [vmem:[%s588 + $0x8] sm:$0xff]
  %v591 = vld [vmem:[%s588 + $0x10] sm:$0xff]
  %v592 = vld [vmem:[%s588 + $0x18] sm:$0xff]
  %v593 = vld [vmem:[%s588 + $0x20] sm:$0xff]
  %v594 = vld [vmem:[%s588 + $0x28] sm:$0xff]
  %v595 = vld [vmem:[%s588 + $0x30] sm:$0xff]
  %v596 = vld [vmem:[%s588 + $0x38] sm:$0xff]
  %v597 = vld [vmem:[%s588 + $0x40] sm:$0xff]
  %v598 = vld [vmem:[%s588 + $0x48] sm:$0xff]
  %v599 = vld [vmem:[%s588 + $0x50] sm:$0xff]
  %v600 = vld [vmem:[%s588 + $0x58] sm:$0xff]
  %v601 = vld [vmem:[%s588 + $0x60] sm:$0xff]
  %v602 = vld [vmem:[%s588 + $0x68] sm:$0xff]
  %v603 = vld [vmem:[%s588 + $0x70] sm:$0xff]
  %v604 = vld [vmem:[%s588 + $0x78] sm:$0xff]
  %v605 = vld [vmem:[%s588 + $0x80] sm:$0xff]
  %v606 = vld [vmem:[%s588 + $0x88] sm:$0xff]
  %v607 = vld [vmem:[%s588 + $0x90] sm:$0xff]
  %v608 = vld [vmem:[%s588 + $0x98] sm:$0xff]
  %v609 = vld [vmem:[%s588 + $0xa0] sm:$0xff]
  %v610 = vld [vmem:[%s588 + $0xa8] sm:$0xff]
  %v611 = vld [vmem:[%s588 + $0xb0] sm:$0xff]
  %v612 = vld [vmem:[%s588 + $0xb8] sm:$0xff]
  %v613 = vld [vmem:[%s588 + $0xc0] sm:$0xff]
  %v614 = vld [vmem:[%s588 + $0xc8] sm:$0xff]
  %v615 = vld [vmem:[%s588 + $0xd0] sm:$0xff]
  %v616 = vld [vmem:[%s588 + $0xd8] sm:$0xff]
  %v617 = vld [vmem:[%s588 + $0xe0] sm:$0xff]
  %v618 = vld [vmem:[%s588 + $0xe8] sm:$0xff]
  %v619 = vld [vmem:[%s588 + $0xf0] sm:$0xff]
  %v620 = vld [vmem:[%s588 + $0xf8] sm:$0xff]
  %v653 = vunpack.c.l.b16 %v589
  %v654 = vunpack.c.h.b16 %v589
  %v655 = vunpack.c.l.b16 %v590
  %v656 = vunpack.c.h.b16 %v590
  %v657 = vunpack.c.l.b16 %v591
  %v658 = vunpack.c.h.b16 %v591
  %v659 = vunpack.c.l.b16 %v592
  %v660 = vunpack.c.h.b16 %v592
  %v661 = vunpack.c.l.b16 %v593
  %v662 = vunpack.c.h.b16 %v593
  %v663 = vunpack.c.l.b16 %v594
  %v664 = vunpack.c.h.b16 %v594
  %v665 = vunpack.c.l.b16 %v595
  %v666 = vunpack.c.h.b16 %v595
  %v667 = vunpack.c.l.b16 %v596
  %v668 = vunpack.c.h.b16 %v596
  %v669 = vunpack.c.l.b16 %v597
  %v670 = vunpack.c.h.b16 %v597
  %v671 = vunpack.c.l.b16 %v598
  %v672 = vunpack.c.h.b16 %v598
  %v673 = vunpack.c.l.b16 %v599
  %v674 = vunpack.c.h.b16 %v599
  %v675 = vunpack.c.l.b16 %v600
  %v676 = vunpack.c.h.b16 %v600
  %v677 = vunpack.c.l.b16 %v601
  %v678 = vunpack.c.h.b16 %v601
  %v679 = vunpack.c.l.b16 %v602
  %v680 = vunpack.c.h.b16 %v602
  %v681 = vunpack.c.l.b16 %v603
  %v682 = vunpack.c.h.b16 %v603
  %v683 = vunpack.c.l.b16 %v604
  %v684 = vunpack.c.h.b16 %v604
  %v685 = vunpack.c.l.b16 %v605
  %v686 = vunpack.c.h.b16 %v605
  %v687 = vunpack.c.l.b16 %v606
  %v688 = vunpack.c.h.b16 %v606
  %v689 = vunpack.c.l.b16 %v607
  %v690 = vunpack.c.h.b16 %v607
  %v691 = vunpack.c.l.b16 %v608
  %v692 = vunpack.c.h.b16 %v608
  %v693 = vunpack.c.l.b16 %v609
  %v694 = vunpack.c.h.b16 %v609
  %v695 = vunpack.c.l.b16 %v610
  %v696 = vunpack.c.h.b16 %v610
  %v697 = vunpack.c.l.b16 %v611
  %v698 = vunpack.c.h.b16 %v611
  %v699 = vunpack.c.l.b16 %v612
  %v700 = vunpack.c.h.b16 %v612
  %v701 = vunpack.c.l.b16 %v613
  %v702 = vunpack.c.h.b16 %v613
  %v703 = vunpack.c.l.b16 %v614
  %v704 = vunpack.c.h.b16 %v614
  %v705 = vunpack.c.l.b16 %v615
  %v706 = vunpack.c.h.b16 %v615
  %v707 = vunpack.c.l.b16 %v616
  %v708 = vunpack.c.h.b16 %v616
  %v709 = vunpack.c.l.b16 %v617
  %v710 = vunpack.c.h.b16 %v617
  %v711 = vunpack.c.l.b16 %v618
  %v712 = vunpack.c.h.b16 %v618
  %v713 = vunpack.c.l.b16 %v619
  %v714 = vunpack.c.h.b16 %v619
  %v715 = vunpack.c.l.b16 %v620
  %v716 = vunpack.c.h.b16 %v620
  %v717 = vpack.c.b16 %v657, %v653
  %v718 = vpack.c.b16 %v658, %v654
  %v719 = vpack.c.b16 %v659, %v655
  %v720 = vpack.c.b16 %v660, %v656
  %v721 = vpack.c.b16 %v665, %v661
  %v722 = vpack.c.b16 %v666, %v662
  %v723 = vpack.c.b16 %v667, %v663
  %v724 = vpack.c.b16 %v668, %v664
  %v725 = vpack.c.b16 %v673, %v669
  %v726 = vpack.c.b16 %v674, %v670
  %v727 = vpack.c.b16 %v675, %v671
  %v728 = vpack.c.b16 %v676, %v672
  %v729 = vpack.c.b16 %v681, %v677
  %v730 = vpack.c.b16 %v682, %v678
  %v731 = vpack.c.b16 %v683, %v679
  %v732 = vpack.c.b16 %v684, %v680
  %v733 = vpack.c.b16 %v689, %v685
  %v734 = vpack.c.b16 %v690, %v686
  %v735 = vpack.c.b16 %v691, %v687
  %v736 = vpack.c.b16 %v692, %v688
  %v737 = vpack.c.b16 %v697, %v693
  %v738 = vpack.c.b16 %v698, %v694
  %v739 = vpack.c.b16 %v699, %v695
  %v740 = vpack.c.b16 %v700, %v696
  %v741 = vpack.c.b16 %v705, %v701
  %v742 = vpack.c.b16 %v706, %v702
  %v743 = vpack.c.b16 %v707, %v703
  %v744 = vpack.c.b16 %v708, %v704
  %v745 = vpack.c.b16 %v713, %v709
  %v746 = vpack.c.b16 %v714, %v710
  %v747 = vpack.c.b16 %v715, %v711
  %v748 = vpack.c.b16 %v716, %v712
  %781 = vmatprep.subr.bf16.mxu0 %v718
  %782 = vmatpush1.bf16.msra.mxu0 %v717
  %783 = vmatprep.subr.bf16.mxu0 %v722
  %784 = vmatpush1.bf16.msra.mxu0 %v721
  %785 = vmatprep.subr.bf16.mxu0 %v726
  %786 = vmatpush1.bf16.msra.mxu0 %v725
  %787 = vmatprep.subr.bf16.mxu0 %v730
  %788 = vmatpush1.bf16.msra.mxu0 %v729
  %789 = vmatprep.subr.bf16.mxu0 %v734
  %790 = vmatpush1.bf16.msra.mxu0 %v733
  %791 = vmatprep.subr.bf16.mxu0 %v738
  %792 = vmatpush1.bf16.msra.mxu0 %v737
  %793 = vmatprep.subr.bf16.mxu0 %v742
  %794 = vmatpush1.bf16.msra.mxu0 %v741
  %795 = vmatprep.subr.bf16.mxu0 %v746
  %796 = vmatpush1.bf16.msra.mxu0 %v745
  %797 = vmatprep.subr.bf16.mxu0 0
  %798 = vmatpush1.bf16.msra.mxu0 0
  %799 = vmatprep.subr.bf16.mxu0 0
  %800 = vmatpush1.bf16.msra.mxu0 0
  %801 = vmatprep.subr.bf16.mxu0 0
  %802 = vmatpush1.bf16.msra.mxu0 0
  %803 = vmatprep.subr.bf16.mxu0 0
  %804 = vmatpush1.bf16.msra.mxu0 0
  %805 = vmatprep.subr.bf16.mxu0 0
  %806 = vmatpush1.bf16.msra.mxu0 0
  %807 = vmatprep.subr.bf16.mxu0 0
  %808 = vmatpush1.bf16.msra.mxu0 0
  %809 = vmatprep.subr.bf16.mxu0 0
  %810 = vmatpush1.bf16.msra.mxu0 0
  %811 = vmatprep.subr.bf16.mxu0 0
  %812 = vmatpush1.bf16.msra.mxu0 0
  %813 = vmatprep.mubr.bf16.mxu0 0
  %814 = vmatmul.mubr.bf16.gmra.mrb[0].mxu0 %v53
  %v815 = vpop.f32.mrb[0].mxu0
  %v816 = vadd.f32 0.0, %v815
  %v817 = vpop.f32.mrb[0].mxu0
  %v818 = vadd.f32 0.0, %v817
  %v819 = vpop.f32.mrb[0].mxu0
  %v820 = vadd.f32 0.0, %v819
  %v821 = vpop.f32.mrb[0].mxu0
  %v822 = vadd.f32 0.0, %v821
  %823 = vdwg.mxu0
  %824 = vmatprep.subr.bf16.mxu0 %v720
  %825 = vmatpush1.bf16.msra.mxu0 %v719
  %826 = vmatprep.subr.bf16.mxu0 %v724
  %827 = vmatpush1.bf16.msra.mxu0 %v723
  %828 = vmatprep.subr.bf16.mxu0 %v728
  %829 = vmatpush1.bf16.msra.mxu0 %v727
  %830 = vmatprep.subr.bf16.mxu0 %v732
  %831 = vmatpush1.bf16.msra.mxu0 %v731
  %832 = vmatprep.subr.bf16.mxu0 %v736
  %833 = vmatpush1.bf16.msra.mxu0 %v735
  %834 = vmatprep.subr.bf16.mxu0 %v740
  %835 = vmatpush1.bf16.msra.mxu0 %v739
  %836 = vmatprep.subr.bf16.mxu0 %v744
  %837 = vmatpush1.bf16.msra.mxu0 %v743
  %838 = vmatprep.subr.bf16.mxu0 %v748
  %839 = vmatpush1.bf16.msra.mxu0 %v747
  %840 = vmatprep.subr.bf16.mxu0 0
  %841 = vmatpush1.bf16.msra.mxu0 0
  %842 = vmatprep.subr.bf16.mxu0 0
  %843 = vmatpush1.bf16.msra.mxu0 0
  %844 = vmatprep.subr.bf16.mxu0 0
  %845 = vmatpush1.bf16.msra.mxu0 0
  %846 = vmatprep.subr.bf16.mxu0 0
  %847 = vmatpush1.bf16.msra.mxu0 0
  %848 = vmatprep.subr.bf16.mxu0 0
  %849 = vmatpush1.bf16.msra.mxu0 0
  %850 = vmatprep.subr.bf16.mxu0 0
  %851 = vmatpush1.bf16.msra.mxu0 0
  %852 = vmatprep.subr.bf16.mxu0 0
  %853 = vmatpush1.bf16.msra.mxu0 0
  %854 = vmatprep.subr.bf16.mxu0 0
  %855 = vmatpush1.bf16.msra.mxu0 0
  %856 = vmatprep.mubr.bf16.mxu0 0
  %857 = vmatmul.mubr.bf16.gmra.mrb[0].mxu0 %v53
  %v858 = vpop.f32.mrb[0].mxu0
  %v859 = vadd.f32 0.0, %v858
  %v860 = vpop.f32.mrb[0].mxu0
  %v861 = vadd.f32 0.0, %v860
  %v862 = vpop.f32.mrb[0].mxu0
  %v863 = vadd.f32 0.0, %v862
  %v864 = vpop.f32.mrb[0].mxu0
  %v865 = vadd.f32 0.0, %v864
  %866 = vdwg.mxu0
  %v867 = vmax.f32 %v580, %v816
  %v868 = vmax.f32 %v581, %v818
  %v869 = vmax.f32 %v582, %v859
  %v870 = vmax.f32 %v583, %v861
  %v871 = vmax.f32 %v584, %v820
  %v872 = vmax.f32 %v585, %v822
  %v873 = vmax.f32 %v586, %v863
  %v874 = vmax.f32 %v587, %v865
  %s875 = scalar_lea.vmem %s0, 768
  %v876 = vld [vmem:[%s875] sm:$0xff]
  %v877 = vld [vmem:[%s875 + $0x8] sm:$0xff]
  %v878 = vld [vmem:[%s875 + $0x10] sm:$0xff]
  %v879 = vld [vmem:[%s875 + $0x18] sm:$0xff]
  %v880 = vld [vmem:[%s875 + $0x20] sm:$0xff]
  %v881 = vld [vmem:[%s875 + $0x28] sm:$0xff]
  %v882 = vld [vmem:[%s875 + $0x30] sm:$0xff]
  %v883 = vld [vmem:[%s875 + $0x38] sm:$0xff]
  %v884 = vld [vmem:[%s875 + $0x40] sm:$0xff]
  %v885 = vld [vmem:[%s875 + $0x48] sm:$0xff]
  %v886 = vld [vmem:[%s875 + $0x50] sm:$0xff]
  %v887 = vld [vmem:[%s875 + $0x58] sm:$0xff]
  %v888 = vld [vmem:[%s875 + $0x60] sm:$0xff]
  %v889 = vld [vmem:[%s875 + $0x68] sm:$0xff]
  %v890 = vld [vmem:[%s875 + $0x70] sm:$0xff]
  %v891 = vld [vmem:[%s875 + $0x78] sm:$0xff]
  %v892 = vld [vmem:[%s875 + $0x80] sm:$0xff]
  %v893 = vld [vmem:[%s875 + $0x88] sm:$0xff]
  %v894 = vld [vmem:[%s875 + $0x90] sm:$0xff]
  %v895 = vld [vmem:[%s875 + $0x98] sm:$0xff]
  %v896 = vld [vmem:[%s875 + $0xa0] sm:$0xff]
  %v897 = vld [vmem:[%s875 + $0xa8] sm:$0xff]
  %v898 = vld [vmem:[%s875 + $0xb0] sm:$0xff]
  %v899 = vld [vmem:[%s875 + $0xb8] sm:$0xff]
  %v900 = vld [vmem:[%s875 + $0xc0] sm:$0xff]
  %v901 = vld [vmem:[%s875 + $0xc8] sm:$0xff]
  %v902 = vld [vmem:[%s875 + $0xd0] sm:$0xff]
  %v903 = vld [vmem:[%s875 + $0xd8] sm:$0xff]
  %v904 = vld [vmem:[%s875 + $0xe0] sm:$0xff]
  %v905 = vld [vmem:[%s875 + $0xe8] sm:$0xff]
  %v906 = vld [vmem:[%s875 + $0xf0] sm:$0xff]
  %v907 = vld [vmem:[%s875 + $0xf8] sm:$0xff]
  %v940 = vunpack.c.l.b16 %v876
  %v941 = vunpack.c.h.b16 %v876
  %v942 = vunpack.c.l.b16 %v877
  %v943 = vunpack.c.h.b16 %v877
  %v944 = vunpack.c.l.b16 %v878
  %v945 = vunpack.c.h.b16 %v878
  %v946 = vunpack.c.l.b16 %v879
  %v947 = vunpack.c.h.b16 %v879
  %v948 = vunpack.c.l.b16 %v880
  %v949 = vunpack.c.h.b16 %v880
  %v950 = vunpack.c.l.b16 %v881
  %v951 = vunpack.c.h.b16 %v881
  %v952 = vunpack.c.l.b16 %v882
  %v953 = vunpack.c.h.b16 %v882
  %v954 = vunpack.c.l.b16 %v883
  %v955 = vunpack.c.h.b16 %v883
  %v956 = vunpack.c.l.b16 %v884
  %v957 = vunpack.c.h.b16 %v884
  %v958 = vunpack.c.l.b16 %v885
  %v959 = vunpack.c.h.b16 %v885
  %v960 = vunpack.c.l.b16 %v886
  %v961 = vunpack.c.h.b16 %v886
  %v962 = vunpack.c.l.b16 %v887
  %v963 = vunpack.c.h.b16 %v887
  %v964 = vunpack.c.l.b16 %v888
  %v965 = vunpack.c.h.b16 %v888
  %v966 = vunpack.c.l.b16 %v889
  %v967 = vunpack.c.h.b16 %v889
  %v968 = vunpack.c.l.b16 %v890
  %v969 = vunpack.c.h.b16 %v890
  %v970 = vunpack.c.l.b16 %v891
  %v971 = vunpack.c.h.b16 %v891
  %v972 = vunpack.c.l.b16 %v892
  %v973 = vunpack.c.h.b16 %v892
  %v974 = vunpack.c.l.b16 %v893
  %v975 = vunpack.c.h.b16 %v893
  %v976 = vunpack.c.l.b16 %v894
  %v977 = vunpack.c.h.b16 %v894
  %v978 = vunpack.c.l.b16 %v895
  %v979 = vunpack.c.h.b16 %v895
  %v980 = vunpack.c.l.b16 %v896
  %v981 = vunpack.c.h.b16 %v896
  %v982 = vunpack.c.l.b16 %v897
  %v983 = vunpack.c.h.b16 %v897
  %v984 = vunpack.c.l.b16 %v898
  %v985 = vunpack.c.h.b16 %v898
  %v986 = vunpack.c.l.b16 %v899
  %v987 = vunpack.c.h.b16 %v899
  %v988 = vunpack.c.l.b16 %v900
  %v989 = vunpack.c.h.b16 %v900
  %v990 = vunpack.c.l.b16 %v901
  %v991 = vunpack.c.h.b16 %v901
  %v992 = vunpack.c.l.b16 %v902
  %v993 = vunpack.c.h.b16 %v902
  %v994 = vunpack.c.l.b16 %v903
  %v995 = vunpack.c.h.b16 %v903
  %v996 = vunpack.c.l.b16 %v904
  %v997 = vunpack.c.h.b16 %v904
  %v998 = vunpack.c.l.b16 %v905
  %v999 = vunpack.c.h.b16 %v905
  %v1000 = vunpack.c.l.b16 %v906
  %v1001 = vunpack.c.h.b16 %v906
  %v1002 = vunpack.c.l.b16 %v907
  %v1003 = vunpack.c.h.b16 %v907
  %v1004 = vpack.c.b16 %v944, %v940
  %v1005 = vpack.c.b16 %v945, %v941
  %v1006 = vpack.c.b16 %v946, %v942
  %v1007 = vpack.c.b16 %v947, %v943
  %v1008 = vpack.c.b16 %v952, %v948
  %v1009 = vpack.c.b16 %v953, %v949
  %v1010 = vpack.c.b16 %v954, %v950
  %v1011 = vpack.c.b16 %v955, %v951
  %v1012 = vpack.c.b16 %v960, %v956
  %v1013 = vpack.c.b16 %v961, %v957
  %v1014 = vpack.c.b16 %v962, %v958
  %v1015 = vpack.c.b16 %v963, %v959
  %v1016 = vpack.c.b16 %v968, %v964
  %v1017 = vpack.c.b16 %v969, %v965
  %v1018 = vpack.c.b16 %v970, %v966
  %v1019 = vpack.c.b16 %v971, %v967
  %v1020 = vpack.c.b16 %v976, %v972
  %v1021 = vpack.c.b16 %v977, %v973
  %v1022 = vpack.c.b16 %v978, %v974
  %v1023 = vpack.c.b16 %v979, %v975
  %v1024 = vpack.c.b16 %v984, %v980
  %v1025 = vpack.c.b16 %v985, %v981
  %v1026 = vpack.c.b16 %v986, %v982
  %v1027 = vpack.c.b16 %v987, %v983
  %v1028 = vpack.c.b16 %v992, %v988
  %v1029 = vpack.c.b16 %v993, %v989
  %v1030 = vpack.c.b16 %v994, %v990
  %v1031 = vpack.c.b16 %v995, %v991
  %v1032 = vpack.c.b16 %v1000, %v996
  %v1033 = vpack.c.b16 %v1001, %v997
  %v1034 = vpack.c.b16 %v1002, %v998
  %v1035 = vpack.c.b16 %v1003, %v999
  %1068 = vmatprep.subr.bf16.mxu0 %v1005
  %1069 = vmatpush1.bf16.msra.mxu0 %v1004
  %1070 = vmatprep.subr.bf16.mxu0 %v1009
  %1071 = vmatpush1.bf16.msra.mxu0 %v1008
  %1072 = vmatprep.subr.bf16.mxu0 %v1013
  %1073 = vmatpush1.bf16.msra.mxu0 %v1012
  %1074 = vmatprep.subr.bf16.mxu0 %v1017
  %1075 = vmatpush1.bf16.msra.mxu0 %v1016
  %1076 = vmatprep.subr.bf16.mxu0 %v1021
  %1077 = vmatpush1.bf16.msra.mxu0 %v1020
  %1078 = vmatprep.subr.bf16.mxu0 %v1025
  %1079 = vmatpush1.bf16.msra.mxu0 %v1024
  %1080 = vmatprep.subr.bf16.mxu0 %v1029
  %1081 = vmatpush1.bf16.msra.mxu0 %v1028
  %1082 = vmatprep.subr.bf16.mxu0 %v1033
  %1083 = vmatpush1.bf16.msra.mxu0 %v1032
  %1084 = vmatprep.subr.bf16.mxu0 0
  %1085 = vmatpush1.bf16.msra.mxu0 0
  %1086 = vmatprep.subr.bf16.mxu0 0
  %1087 = vmatpush1.bf16.msra.mxu0 0
  %1088 = vmatprep.subr.bf16.mxu0 0
  %1089 = vmatpush1.bf16.msra.mxu0 0
  %1090 = vmatprep.subr.bf16.mxu0 0
  %1091 = vmatpush1.bf16.msra.mxu0 0
  %1092 = vmatprep.subr.bf16.mxu0 0
  %1093 = vmatpush1.bf16.msra.mxu0 0
  %1094 = vmatprep.subr.bf16.mxu0 0
  %1095 = vmatpush1.bf16.msra.mxu0 0
  %1096 = vmatprep.subr.bf16.mxu0 0
  %1097 = vmatpush1.bf16.msra.mxu0 0
  %1098 = vmatprep.subr.bf16.mxu0 0
  %1099 = vmatpush1.bf16.msra.mxu0 0
  %1100 = vmatprep.mubr.bf16.mxu0 0
  %1101 = vmatmul.mubr.bf16.gmra.mrb[0].mxu0 %v53
  %v1102 = vpop.f32.mrb[0].mxu0
  %v1103 = vadd.f32 0.0, %v1102
  %v1104 = vpop.f32.mrb[0].mxu0
  %v1105 = vadd.f32 0.0, %v1104
  %v1106 = vpop.f32.mrb[0].mxu0
  %v1107 = vadd.f32 0.0, %v1106
  %v1108 = vpop.f32.mrb[0].mxu0
  %v1109 = vadd.f32 0.0, %v1108
  %1110 = vdwg.mxu0
  %1111 = vmatprep.subr.bf16.mxu0 %v1007
  %1112 = vmatpush1.bf16.msra.mxu0 %v1006
  %1113 = vmatprep.subr.bf16.mxu0 %v1011
  %1114 = vmatpush1.bf16.msra.mxu0 %v1010
  %1115 = vmatprep.subr.bf16.mxu0 %v1015
  %1116 = vmatpush1.bf16.msra.mxu0 %v1014
  %1117 = vmatprep.subr.bf16.mxu0 %v1019
  %1118 = vmatpush1.bf16.msra.mxu0 %v1018
  %1119 = vmatprep.subr.bf16.mxu0 %v1023
  %1120 = vmatpush1.bf16.msra.mxu0 %v1022
  %1121 = vmatprep.subr.bf16.mxu0 %v1027
  %1122 = vmatpush1.bf16.msra.mxu0 %v1026
  %1123 = vmatprep.subr.bf16.mxu0 %v1031
  %1124 = vmatpush1.bf16.msra.mxu0 %v1030
  %1125 = vmatprep.subr.bf16.mxu0 %v1035
  %1126 = vmatpush1.bf16.msra.mxu0 %v1034
  %1127 = vmatprep.subr.bf16.mxu0 0
  %1128 = vmatpush1.bf16.msra.mxu0 0
  %1129 = vmatprep.subr.bf16.mxu0 0
  %1130 = vmatpush1.bf16.msra.mxu0 0
  %1131 = vmatprep.subr.bf16.mxu0 0
  %1132 = vmatpush1.bf16.msra.mxu0 0
  %1133 = vmatprep.subr.bf16.mxu0 0
  %1134 = vmatpush1.bf16.msra.mxu0 0
  %1135 = vmatprep.subr.bf16.mxu0 0
  %1136 = vmatpush1.bf16.msra.mxu0 0
  %1137 = vmatprep.subr.bf16.mxu0 0
  %1138 = vmatpush1.bf16.msra.mxu0 0
  %1139 = vmatprep.subr.bf16.mxu0 0
  %1140 = vmatpush1.bf16.msra.mxu0 0
  %1141 = vmatprep.subr.bf16.mxu0 0
  %1142 = vmatpush1.bf16.msra.mxu0 0
  %1143 = vmatprep.mubr.bf16.mxu0 0
  %1144 = vmatmul.mubr.bf16.gmra.mrb[0].mxu0 %v53
  %v1145 = vpop.f32.mrb[0].mxu0
  %v1146 = vadd.f32 0.0, %v1145
  %v1147 = vpop.f32.mrb[0].mxu0
  %v1148 = vadd.f32 0.0, %v1147
  %v1149 = vpop.f32.mrb[0].mxu0
  %v1150 = vadd.f32 0.0, %v1149
  %v1151 = vpop.f32.mrb[0].mxu0
  %v1152 = vadd.f32 0.0, %v1151
  %1153 = vdwg.mxu0
  %v1154 = vmax.f32 %v867, %v1103
  %v1155 = vmax.f32 %v868, %v1105
  %v1156 = vmax.f32 %v869, %v1146
  %v1157 = vmax.f32 %v870, %v1148
  %v1158 = vmax.f32 %v871, %v1107
  %v1159 = vmax.f32 %v872, %v1109
  %v1160 = vmax.f32 %v873, %v1150
  %v1161 = vmax.f32 %v874, %v1152
  %v1162 = vld [vmem:[%s2] sm:$0xff]
  %v1163 = vld [vmem:[%s2 + $0x8] sm:$0xff]
  %1165 = vset.pattern.permute.xlu0 0
  %1166 = vperm.xlu0 %1165, %v1162
  %v1167 = vpop.permute.xlu0 %1166
  %1170 = vset.pattern.permute.xlu0 0
  %1171 = vperm.xlu0 %1170, %v1163
  %v1172 = vpop.permute.xlu0 %1171
  %v1174 = vadd.f32 %v1154, %v1167
  %v1175 = vadd.f32 %v1155, %v1167
  %v1176 = vadd.f32 %v1156, %v1167
  %v1177 = vadd.f32 %v1157, %v1167
  %v1178 = vadd.f32 %v1158, %v1172
  %v1179 = vadd.f32 %v1159, %v1172
  %v1180 = vadd.f32 %v1160, %v1172
  %v1181 = vadd.f32 %v1161, %v1172
  %v1182 = vmax.f32 %v1174, 0.0
  %v1183 = vmax.f32 %v1175, 0.0
  %v1184 = vmax.f32 %v1176, 0.0
  %v1185 = vmax.f32 %v1177, 0.0
  %v1186 = vmax.f32 %v1178, 0.0
  %v1187 = vmax.f32 %v1179, 0.0
  %v1188 = vmax.f32 %v1180, 0.0
  %v1189 = vmax.f32 %v1181, 0.0
  %1190 = vst [vmem:[%s3] sm:$0xff] %v1182
  %1191 = vst [vmem:[%s3 + $0x8] sm:$0xff] %v1183
  %1192 = vst [vmem:[%s3 + $0x10] sm:$0xff] %v1184
  %1193 = vst [vmem:[%s3 + $0x18] sm:$0xff] %v1185
  %1194 = vst [vmem:[%s3 + $0x20] sm:$0xff] %v1186
  %1195 = vst [vmem:[%s3 + $0x28] sm:$0xff] %v1187
  %1196 = vst [vmem:[%s3 + $0x30] sm:$0xff] %v1188
  %1197 = vst [vmem:[%s3 + $0x38] sm:$0xff] %v1189
  // Predicated region
  $region14: #{net_forward.3} parent=0 // pred_check
    _
  $region15: #{net_forward.3} parent=0 // pred_check_branch
    %1199 = sbr.rel (0) target = $region17
  $region16: #{net_forward.3} parent=0 // pred_region
    _
  $region17: #{net_forward.3} parent=0 // pred_fallthru
    _
  // Predicated region
  $region18: #{net_forward.3} parent=0 // pred_check
    _
  $region19: #{net_forward.3} parent=0 // pred_check_branch
    %1201 = sbr.rel (0) target = $region21
  $region20: #{net_forward.3} parent=0 // pred_region
    _
  $region21: #{net_forward.3} parent=0 // pred_fallthru
    _

// kernel: net_forward.4
$region0: #{net_forward.4}
  #allocation0 [shape = 'u32[]', space=smem, size = 0x4, offset = 0x4, fixed_abs, tag = 'smem constant byte address 0x4 - core index']
  #allocation1 [shape = 'u32[144,128]{1,0:T(1,128)}', space=vmem, size = 0x12000, scoped, tag = 'internal scratch']
  %s0 = inlined_call_operand.vmem [shape: bf16[4,256,128], index: 0, kind: input, shape index: {}]
  %s1 = inlined_call_operand.vmem [shape: bf16[16,256], index: 1, kind: input, shape index: {}]
  %s2 = inlined_call_operand.vmem [shape: f32[16,1], index: 2, kind: input, shape index: {}]
  %s3 = inlined_call_operand.vmem [shape: f32[16,128], index: 3, kind: output, shape index: {}]
  %s4 = sld [smem:[#allocation0]]
  $region22: #{net_forward.4} parent=0
    _
  %s6 = ssub.s32 1, %s4
  %s7 = scalar_select 0, %s6, %s4
  // Predicated region
  $region2: #{net_forward.4} parent=0 // pred_check
    _
  $region3: #{net_forward.4} parent=0 // pred_check_branch
    %9 = sbr.rel (0) target = $region5
  $region4: #{net_forward.4} parent=0 // pred_region
    _
  $region5: #{net_forward.4} parent=0 // pred_fallthru
    _
  // Predicated region
  $region6: #{net_forward.4} parent=0 // pred_check
    _
  $region7: #{net_forward.4} parent=0 // pred_check_branch
    %11 = sbr.rel (0) target = $region9
  $region8: #{net_forward.4} parent=0 // pred_region
    _
  $region9: #{net_forward.4} parent=0 // pred_fallthru
    _
  // Predicated region
  $region10: #{net_forward.4} parent=0 // pred_check
    _
  $region11: #{net_forward.4} parent=0 // pred_check_branch
    %13 = sbr.rel (0) target = $region13
  $region12: #{net_forward.4} parent=0 // pred_region
    _
  $region13: #{net_forward.4} parent=0 // pred_fallthru
    _
  %v15 = vld [vmem:[%s1] sm:$0xff]
  %v16 = vld [vmem:[%s1 + $0x8] sm:$0xff]
  %v17 = vld [vmem:[%s0] sm:$0xf]
  %v18 = vld [vmem:[%s0 + $0x4] sm:$0xf]
  %v19 = vld [vmem:[%s0 + $0x8] sm:$0xf]
  %v20 = vld [vmem:[%s0 + $0xc] sm:$0xf]
  %v21 = vld [vmem:[%s0 + $0x10] sm:$0xf]
  %v22 = vld [vmem:[%s0 + $0x14] sm:$0xf]
  %v23 = vld [vmem:[%s0 + $0x18] sm:$0xf]
  %v24 = vld [vmem:[%s0 + $0x1c] sm:$0xf]
  %v25 = vld [vmem:[%s0 + $0x20] sm:$0xf]
  %v26 = vld [vmem:[%s0 + $0x24] sm:$0xf]
  %v27 = vld [vmem:[%s0 + $0x28] sm:$0xf]
  %v28 = vld [vmem:[%s0 + $0x2c] sm:$0xf]
  %v29 = vld [vmem:[%s0 + $0x30] sm:$0xf]
  %v30 = vld [vmem:[%s0 + $0x34] sm:$0xf]
  %v31 = vld [vmem:[%s0 + $0x38] sm:$0xf]
  %v32 = vld [vmem:[%s0 + $0x3c] sm:$0xf]
  %v33 = vld [vmem:[%s0 + $0x40] sm:$0xf]
  %v34 = vld [vmem:[%s0 + $0x44] sm:$0xf]
  %v35 = vld [vmem:[%s0 + $0x48] sm:$0xf]
  %v36 = vld [vmem:[%s0 + $0x4c] sm:$0xf]
  %v37 = vld [vmem:[%s0 + $0x50] sm:$0xf]
  %v38 = vld [vmem:[%s0 + $0x54] sm:$0xf]
  %v39 = vld [vmem:[%s0 + $0x58] sm:$0xf]
  %v40 = vld [vmem:[%s0 + $0x5c] sm:$0xf]
  %v41 = vld [vmem:[%s0 + $0x60] sm:$0xf]
  %v42 = vld [vmem:[%s0 + $0x64] sm:$0xf]
  %v43 = vld [vmem:[%s0 + $0x68] sm:$0xf]
  %v44 = vld [vmem:[%s0 + $0x6c] sm:$0xf]
  %v45 = vld [vmem:[%s0 + $0x70] sm:$0xf]
  %v46 = vld [vmem:[%s0 + $0x74] sm:$0xf]
  %v47 = vld [vmem:[%s0 + $0x78] sm:$0xf]
  %v48 = vld [vmem:[%s0 + $0x7c] sm:$0xf]
  %v51 = vunpack.c.l.b16 %v15
  %v52 = vunpack.c.h.b16 %v15
  %v53 = vunpack.c.l.b16 %v16
  %v54 = vunpack.c.h.b16 %v16
  %v55 = vpack.c.b16 %v53, %v51
  %v56 = vpack.c.b16 %v54, %v52
  %v91 = vunpack.c.l.b16 %v17
  %v92 = vunpack.c.l.b16 %v18
  %v93 = vunpack.c.l.b16 %v19
  %v94 = vunpack.c.l.b16 %v20
  %v95 = vunpack.c.l.b16 %v21
  %v96 = vunpack.c.l.b16 %v22
  %v97 = vunpack.c.l.b16 %v23
  %v98 = vunpack.c.l.b16 %v24
  %v99 = vunpack.c.l.b16 %v25
  %v100 = vunpack.c.l.b16 %v26
  %v101 = vunpack.c.l.b16 %v27
  %v102 = vunpack.c.l.b16 %v28
  %v103 = vunpack.c.l.b16 %v29
  %v104 = vunpack.c.l.b16 %v30
  %v105 = vunpack.c.l.b16 %v31
  %v106 = vunpack.c.l.b16 %v32
  %v107 = vunpack.c.l.b16 %v33
  %v108 = vunpack.c.l.b16 %v34
  %v109 = vunpack.c.l.b16 %v35
  %v110 = vunpack.c.l.b16 %v36
  %v111 = vunpack.c.l.b16 %v37
  %v112 = vunpack.c.l.b16 %v38
  %v113 = vunpack.c.l.b16 %v39
  %v114 = vunpack.c.l.b16 %v40
  %v115 = vunpack.c.l.b16 %v41
  %v116 = vunpack.c.l.b16 %v42
  %v117 = vunpack.c.l.b16 %v43
  %v118 = vunpack.c.l.b16 %v44
  %v119 = vunpack.c.l.b16 %v45
  %v120 = vunpack.c.l.b16 %v46
  %v121 = vunpack.c.l.b16 %v47
  %v122 = vunpack.c.l.b16 %v48
  %v123 = vpack.c.b16 %v92, %v91
  %v124 = vpack.c.b16 %v94, %v93
  %v125 = vpack.c.b16 %v96, %v95
  %v126 = vpack.c.b16 %v98, %v97
  %v127 = vpack.c.b16 %v100, %v99
  %v128 = vpack.c.b16 %v102, %v101
  %v129 = vpack.c.b16 %v104, %v103
  %v130 = vpack.c.b16 %v106, %v105
  %v131 = vpack.c.b16 %v108, %v107
  %v132 = vpack.c.b16 %v110, %v109
  %v133 = vpack.c.b16 %v112, %v111
  %v134 = vpack.c.b16 %v114, %v113
  %v135 = vpack.c.b16 %v116, %v115
  %v136 = vpack.c.b16 %v118, %v117
  %v137 = vpack.c.b16 %v120, %v119
  %v138 = vpack.c.b16 %v122, %v121
  %155 = vmatprep.subr.bf16.mxu0 0
  %156 = vmatpush1.bf16.msra.mxu0 %v123
  %157 = vmatprep.subr.bf16.mxu0 0
  %158 = vmatpush1.bf16.msra.mxu0 %v124
  %159 = vmatprep.subr.bf16.mxu0 0
  %160 = vmatpush1.bf16.msra.mxu0 %v125
  %161 = vmatprep.subr.bf16.mxu0 0
  %162 = vmatpush1.bf16.msra.mxu0 %v126
  %163 = vmatprep.subr.bf16.mxu0 0
  %164 = vmatpush1.bf16.msra.mxu0 %v127
  %165 = vmatprep.subr.bf16.mxu0 0
  %166 = vmatpush1.bf16.msra.mxu0 %v128
  %167 = vmatprep.subr.bf16.mxu0 0
  %168 = vmatpush1.bf16.msra.mxu0 %v129
  %169 = vmatprep.subr.bf16.mxu0 0
  %170 = vmatpush1.bf16.msra.mxu0 %v130
  %171 = vmatprep.subr.bf16.mxu0 0
  %172 = vmatpush1.bf16.msra.mxu0 %v131
  %173 = vmatprep.subr.bf16.mxu0 0
  %174 = vmatpush1.bf16.msra.mxu0 %v132
  %175 = vmatprep.subr.bf16.mxu0 0
  %176 = vmatpush1.bf16.msra.mxu0 %v133
  %177 = vmatprep.subr.bf16.mxu0 0
  %178 = vmatpush1.bf16.msra.mxu0 %v134
  %179 = vmatprep.subr.bf16.mxu0 0
  %180 = vmatpush1.bf16.msra.mxu0 %v135
  %181 = vmatprep.subr.bf16.mxu0 0
  %182 = vmatpush1.bf16.msra.mxu0 %v136
  %183 = vmatprep.subr.bf16.mxu0 0
  %184 = vmatpush1.bf16.msra.mxu0 %v137
  %185 = vmatprep.subr.bf16.mxu0 0
  %186 = vmatpush1.bf16.msra.mxu0 %v138
  %187 = vmatprep.mubr.bf16.mxu0 %v56
  %188 = vmatmul.mubr.bf16.gmra.mrb[0].mxu0 %v55
  %v189 = vpop.f32.mrb[0].mxu0
  %v190 = vadd.f32 0.0, %v189
  %v191 = vpop.f32.mrb[0].mxu0
  %v192 = vpop.f32.mrb[0].mxu0
  %v193 = vadd.f32 0.0, %v192
  %v194 = vpop.f32.mrb[0].mxu0
  %195 = vdwg.mxu0
  %s196 = scalar_lea.vmem %s0, 128
  %v197 = vld [vmem:[%s196] sm:$0xf]
  %v198 = vld [vmem:[%s196 + $0x4] sm:$0xf]
  %v199 = vld [vmem:[%s196 + $0x8] sm:$0xf]
  %v200 = vld [vmem:[%s196 + $0xc] sm:$0xf]
  %v201 = vld [vmem:[%s196 + $0x10] sm:$0xf]
  %v202 = vld [vmem:[%s196 + $0x14] sm:$0xf]
  %v203 = vld [vmem:[%s196 + $0x18] sm:$0xf]
  %v204 = vld [vmem:[%s196 + $0x1c] sm:$0xf]
  %v205 = vld [vmem:[%s196 + $0x20] sm:$0xf]
  %v206 = vld [vmem:[%s196 + $0x24] sm:$0xf]
  %v207 = vld [vmem:[%s196 + $0x28] sm:$0xf]
  %v208 = vld [vmem:[%s196 + $0x2c] sm:$0xf]
  %v209 = vld [vmem:[%s196 + $0x30] sm:$0xf]
  %v210 = vld [vmem:[%s196 + $0x34] sm:$0xf]
  %v211 = vld [vmem:[%s196 + $0x38] sm:$0xf]
  %v212 = vld [vmem:[%s196 + $0x3c] sm:$0xf]
  %v213 = vld [vmem:[%s196 + $0x40] sm:$0xf]
  %v214 = vld [vmem:[%s196 + $0x44] sm:$0xf]
  %v215 = vld [vmem:[%s196 + $0x48] sm:$0xf]
  %v216 = vld [vmem:[%s196 + $0x4c] sm:$0xf]
  %v217 = vld [vmem:[%s196 + $0x50] sm:$0xf]
  %v218 = vld [vmem:[%s196 + $0x54] sm:$0xf]
  %v219 = vld [vmem:[%s196 + $0x58] sm:$0xf]
  %v220 = vld [vmem:[%s196 + $0x5c] sm:$0xf]
  %v221 = vld [vmem:[%s196 + $0x60] sm:$0xf]
  %v222 = vld [vmem:[%s196 + $0x64] sm:$0xf]
  %v223 = vld [vmem:[%s196 + $0x68] sm:$0xf]
  %v224 = vld [vmem:[%s196 + $0x6c] sm:$0xf]
  %v225 = vld [vmem:[%s196 + $0x70] sm:$0xf]
  %v226 = vld [vmem:[%s196 + $0x74] sm:$0xf]
  %v227 = vld [vmem:[%s196 + $0x78] sm:$0xf]
  %v228 = vld [vmem:[%s196 + $0x7c] sm:$0xf]
  %v261 = vunpack.c.l.b16 %v197
  %v262 = vunpack.c.l.b16 %v198
  %v263 = vunpack.c.l.b16 %v199
  %v264 = vunpack.c.l.b16 %v200
  %v265 = vunpack.c.l.b16 %v201
  %v266 = vunpack.c.l.b16 %v202
  %v267 = vunpack.c.l.b16 %v203
  %v268 = vunpack.c.l.b16 %v204
  %v269 = vunpack.c.l.b16 %v205
  %v270 = vunpack.c.l.b16 %v206
  %v271 = vunpack.c.l.b16 %v207
  %v272 = vunpack.c.l.b16 %v208
  %v273 = vunpack.c.l.b16 %v209
  %v274 = vunpack.c.l.b16 %v210
  %v275 = vunpack.c.l.b16 %v211
  %v276 = vunpack.c.l.b16 %v212
  %v277 = vunpack.c.l.b16 %v213
  %v278 = vunpack.c.l.b16 %v214
  %v279 = vunpack.c.l.b16 %v215
  %v280 = vunpack.c.l.b16 %v216
  %v281 = vunpack.c.l.b16 %v217
  %v282 = vunpack.c.l.b16 %v218
  %v283 = vunpack.c.l.b16 %v219
  %v284 = vunpack.c.l.b16 %v220
  %v285 = vunpack.c.l.b16 %v221
  %v286 = vunpack.c.l.b16 %v222
  %v287 = vunpack.c.l.b16 %v223
  %v288 = vunpack.c.l.b16 %v224
  %v289 = vunpack.c.l.b16 %v225
  %v290 = vunpack.c.l.b16 %v226
  %v291 = vunpack.c.l.b16 %v227
  %v292 = vunpack.c.l.b16 %v228
  %v293 = vpack.c.b16 %v262, %v261
  %v294 = vpack.c.b16 %v264, %v263
  %v295 = vpack.c.b16 %v266, %v265
  %v296 = vpack.c.b16 %v268, %v267
  %v297 = vpack.c.b16 %v270, %v269
  %v298 = vpack.c.b16 %v272, %v271
  %v299 = vpack.c.b16 %v274, %v273
  %v300 = vpack.c.b16 %v276, %v275
  %v301 = vpack.c.b16 %v278, %v277
  %v302 = vpack.c.b16 %v280, %v279
  %v303 = vpack.c.b16 %v282, %v281
  %v304 = vpack.c.b16 %v284, %v283
  %v305 = vpack.c.b16 %v286, %v285
  %v306 = vpack.c.b16 %v288, %v287
  %v307 = vpack.c.b16 %v290, %v289
  %v308 = vpack.c.b16 %v292, %v291
  %325 = vmatprep.subr.bf16.mxu0 0
  %326 = vmatpush1.bf16.msra.mxu0 %v293
  %327 = vmatprep.subr.bf16.mxu0 0
  %328 = vmatpush1.bf16.msra.mxu0 %v294
  %329 = vmatprep.subr.bf16.mxu0 0
  %330 = vmatpush1.bf16.msra.mxu0 %v295
  %331 = vmatprep.subr.bf16.mxu0 0
  %332 = vmatpush1.bf16.msra.mxu0 %v296
  %333 = vmatprep.subr.bf16.mxu0 0
  %334 = vmatpush1.bf16.msra.mxu0 %v297
  %335 = vmatprep.subr.bf16.mxu0 0
  %336 = vmatpush1.bf16.msra.mxu0 %v298
  %337 = vmatprep.subr.bf16.mxu0 0
  %338 = vmatpush1.bf16.msra.mxu0 %v299
  %339 = vmatprep.subr.bf16.mxu0 0
  %340 = vmatpush1.bf16.msra.mxu0 %v300
  %341 = vmatprep.subr.bf16.mxu0 0
  %342 = vmatpush1.bf16.msra.mxu0 %v301
  %343 = vmatprep.subr.bf16.mxu0 0
  %344 = vmatpush1.bf16.msra.mxu0 %v302
  %345 = vmatprep.subr.bf16.mxu0 0
  %346 = vmatpush1.bf16.msra.mxu0 %v303
  %347 = vmatprep.subr.bf16.mxu0 0
  %348 = vmatpush1.bf16.msra.mxu0 %v304
  %349 = vmatprep.subr.bf16.mxu0 0
  %350 = vmatpush1.bf16.msra.mxu0 %v305
  %351 = vmatprep.subr.bf16.mxu0 0
  %352 = vmatpush1.bf16.msra.mxu0 %v306
  %353 = vmatprep.subr.bf16.mxu0 0
  %354 = vmatpush1.bf16.msra.mxu0 %v307
  %355 = vmatprep.subr.bf16.mxu0 0
  %356 = vmatpush1.bf16.msra.mxu0 %v308
  %357 = vmatprep.mubr.bf16.mxu0 %v56
  %358 = vmatmul.mubr.bf16.gmra.mrb[0].mxu0 %v55
  %v359 = vpop.f32.mrb[0].mxu0
  %v360 = vadd.f32 0.0, %v359
  %v361 = vpop.f32.mrb[0].mxu0
  %v362 = vpop.f32.mrb[0].mxu0
  %v363 = vadd.f32 0.0, %v362
  %v364 = vpop.f32.mrb[0].mxu0
  %365 = vdwg.mxu0
  %v366 = vmax.f32 %v190, %v360
  %v367 = vmax.f32 %v193, %v363
  %s368 = scalar_lea.vmem %s0, 256
  %v369 = vld [vmem:[%s368] sm:$0xf]
  %v370 = vld [vmem:[%s368 + $0x4] sm:$0xf]
  %v371 = vld [vmem:[%s368 + $0x8] sm:$0xf]
  %v372 = vld [vmem:[%s368 + $0xc] sm:$0xf]
  %v373 = vld [vmem:[%s368 + $0x10] sm:$0xf]
  %v374 = vld [vmem:[%s368 + $0x14] sm:$0xf]
  %v375 = vld [vmem:[%s368 + $0x18] sm:$0xf]
  %v376 = vld [vmem:[%s368 + $0x1c] sm:$0xf]
  %v377 = vld [vmem:[%s368 + $0x20] sm:$0xf]
  %v378 = vld [vmem:[%s368 + $0x24] sm:$0xf]
  %v379 = vld [vmem:[%s368 + $0x28] sm:$0xf]
  %v380 = vld [vmem:[%s368 + $0x2c] sm:$0xf]
  %v381 = vld [vmem:[%s368 + $0x30] sm:$0xf]
  %v382 = vld [vmem:[%s368 + $0x34] sm:$0xf]
  %v383 = vld [vmem:[%s368 + $0x38] sm:$0xf]
  %v384 = vld [vmem:[%s368 + $0x3c] sm:$0xf]
  %v385 = vld [vmem:[%s368 + $0x40] sm:$0xf]
  %v386 = vld [vmem:[%s368 + $0x44] sm:$0xf]
  %v387 = vld [vmem:[%s368 + $0x48] sm:$0xf]
  %v388 = vld [vmem:[%s368 + $0x4c] sm:$0xf]
  %v389 = vld [vmem:[%s368 + $0x50] sm:$0xf]
  %v390 = vld [vmem:[%s368 + $0x54] sm:$0xf]
  %v391 = vld [vmem:[%s368 + $0x58] sm:$0xf]
  %v392 = vld [vmem:[%s368 + $0x5c] sm:$0xf]
  %v393 = vld [vmem:[%s368 + $0x60] sm:$0xf]
  %v394 = vld [vmem:[%s368 + $0x64] sm:$0xf]
  %v395 = vld [vmem:[%s368 + $0x68] sm:$0xf]
  %v396 = vld [vmem:[%s368 + $0x6c] sm:$0xf]
  %v397 = vld [vmem:[%s368 + $0x70] sm:$0xf]
  %v398 = vld [vmem:[%s368 + $0x74] sm:$0xf]
  %v399 = vld [vmem:[%s368 + $0x78] sm:$0xf]
  %v400 = vld [vmem:[%s368 + $0x7c] sm:$0xf]
  %v433 = vunpack.c.l.b16 %v369
  %v434 = vunpack.c.l.b16 %v370
  %v435 = vunpack.c.l.b16 %v371
  %v436 = vunpack.c.l.b16 %v372
  %v437 = vunpack.c.l.b16 %v373
  %v438 = vunpack.c.l.b16 %v374
  %v439 = vunpack.c.l.b16 %v375
  %v440 = vunpack.c.l.b16 %v376
  %v441 = vunpack.c.l.b16 %v377
  %v442 = vunpack.c.l.b16 %v378
  %v443 = vunpack.c.l.b16 %v379
  %v444 = vunpack.c.l.b16 %v380
  %v445 = vunpack.c.l.b16 %v381
  %v446 = vunpack.c.l.b16 %v382
  %v447 = vunpack.c.l.b16 %v383
  %v448 = vunpack.c.l.b16 %v384
  %v449 = vunpack.c.l.b16 %v385
  %v450 = vunpack.c.l.b16 %v386
  %v451 = vunpack.c.l.b16 %v387
  %v452 = vunpack.c.l.b16 %v388
  %v453 = vunpack.c.l.b16 %v389
  %v454 = vunpack.c.l.b16 %v390
  %v455 = vunpack.c.l.b16 %v391
  %v456 = vunpack.c.l.b16 %v392
  %v457 = vunpack.c.l.b16 %v393
  %v458 = vunpack.c.l.b16 %v394
  %v459 = vunpack.c.l.b16 %v395
  %v460 = vunpack.c.l.b16 %v396
  %v461 = vunpack.c.l.b16 %v397
  %v462 = vunpack.c.l.b16 %v398
  %v463 = vunpack.c.l.b16 %v399
  %v464 = vunpack.c.l.b16 %v400
  %v465 = vpack.c.b16 %v434, %v433
  %v466 = vpack.c.b16 %v436, %v435
  %v467 = vpack.c.b16 %v438, %v437
  %v468 = vpack.c.b16 %v440, %v439
  %v469 = vpack.c.b16 %v442, %v441
  %v470 = vpack.c.b16 %v444, %v443
  %v471 = vpack.c.b16 %v446, %v445
  %v472 = vpack.c.b16 %v448, %v447
  %v473 = vpack.c.b16 %v450, %v449
  %v474 = vpack.c.b16 %v452, %v451
  %v475 = vpack.c.b16 %v454, %v453
  %v476 = vpack.c.b16 %v456, %v455
  %v477 = vpack.c.b16 %v458, %v457
  %v478 = vpack.c.b16 %v460, %v459
  %v479 = vpack.c.b16 %v462, %v461
  %v480 = vpack.c.b16 %v464, %v463
  %497 = vmatprep.subr.bf16.mxu0 0
  %498 = vmatpush1.bf16.msra.mxu0 %v465
  %499 = vmatprep.subr.bf16.mxu0 0
  %500 = vmatpush1.bf16.msra.mxu0 %v466
  %501 = vmatprep.subr.bf16.mxu0 0
  %502 = vmatpush1.bf16.msra.mxu0 %v467
  %503 = vmatprep.subr.bf16.mxu0 0
  %504 = vmatpush1.bf16.msra.mxu0 %v468
  %505 = vmatprep.subr.bf16.mxu0 0
  %506 = vmatpush1.bf16.msra.mxu0 %v469
  %507 = vmatprep.subr.bf16.mxu0 0
  %508 = vmatpush1.bf16.msra.mxu0 %v470
  %509 = vmatprep.subr.bf16.mxu0 0
  %510 = vmatpush1.bf16.msra.mxu0 %v471
  %511 = vmatprep.subr.bf16.mxu0 0
  %512 = vmatpush1.bf16.msra.mxu0 %v472
  %513 = vmatprep.subr.bf16.mxu0 0
  %514 = vmatpush1.bf16.msra.mxu0 %v473
  %515 = vmatprep.subr.bf16.mxu0 0
  %516 = vmatpush1.bf16.msra.mxu0 %v474
  %517 = vmatprep.subr.bf16.mxu0 0
  %518 = vmatpush1.bf16.msra.mxu0 %v475
  %519 = vmatprep.subr.bf16.mxu0 0
  %520 = vmatpush1.bf16.msra.mxu0 %v476
  %521 = vmatprep.subr.bf16.mxu0 0
  %522 = vmatpush1.bf16.msra.mxu0 %v477
  %523 = vmatprep.subr.bf16.mxu0 0
  %524 = vmatpush1.bf16.msra.mxu0 %v478
  %525 = vmatprep.subr.bf16.mxu0 0
  %526 = vmatpush1.bf16.msra.mxu0 %v479
  %527 = vmatprep.subr.bf16.mxu0 0
  %528 = vmatpush1.bf16.msra.mxu0 %v480
  %529 = vmatprep.mubr.bf16.mxu0 %v56
  %530 = vmatmul.mubr.bf16.gmra.mrb[0].mxu0 %v55
  %v531 = vpop.f32.mrb[0].mxu0
  %v532 = vadd.f32 0.0, %v531
  %v533 = vpop.f32.mrb[0].mxu0
  %v534 = vpop.f32.mrb[0].mxu0
  %v535 = vadd.f32 0.0, %v534
  %v536 = vpop.f32.mrb[0].mxu0
  %537 = vdwg.mxu0
  %v538 = vmax.f32 %v366, %v532
  %v539 = vmax.f32 %v367, %v535
  %s540 = scalar_lea.vmem %s0, 384
  %v541 = vld [vmem:[%s540] sm:$0xf]
  %v542 = vld [vmem:[%s540 + $0x4] sm:$0xf]
  %v543 = vld [vmem:[%s540 + $0x8] sm:$0xf]
  %v544 = vld [vmem:[%s540 + $0xc] sm:$0xf]
  %v545 = vld [vmem:[%s540 + $0x10] sm:$0xf]
  %v546 = vld [vmem:[%s540 + $0x14] sm:$0xf]
  %v547 = vld [vmem:[%s540 + $0x18] sm:$0xf]
  %v548 = vld [vmem:[%s540 + $0x1c] sm:$0xf]
  %v549 = vld [vmem:[%s540 + $0x20] sm:$0xf]
  %v550 = vld [vmem:[%s540 + $0x24] sm:$0xf]
  %v551 = vld [vmem:[%s540 + $0x28] sm:$0xf]
  %v552 = vld [vmem:[%s540 + $0x2c] sm:$0xf]
  %v553 = vld [vmem:[%s540 + $0x30] sm:$0xf]
  %v554 = vld [vmem:[%s540 + $0x34] sm:$0xf]
  %v555 = vld [vmem:[%s540 + $0x38] sm:$0xf]
  %v556 = vld [vmem:[%s540 + $0x3c] sm:$0xf]
  %v557 = vld [vmem:[%s540 + $0x40] sm:$0xf]
  %v558 = vld [vmem:[%s540 + $0x44] sm:$0xf]
  %v559 = vld [vmem:[%s540 + $0x48] sm:$0xf]
  %v560 = vld [vmem:[%s540 + $0x4c] sm:$0xf]
  %v561 = vld [vmem:[%s540 + $0x50] sm:$0xf]
  %v562 = vld [vmem:[%s540 + $0x54] sm:$0xf]
  %v563 = vld [vmem:[%s540 + $0x58] sm:$0xf]
  %v564 = vld [vmem:[%s540 + $0x5c] sm:$0xf]
  %v565 = vld [vmem:[%s540 + $0x60] sm:$0xf]
  %v566 = vld [vmem:[%s540 + $0x64] sm:$0xf]
  %v567 = vld [vmem:[%s540 + $0x68] sm:$0xf]
  %v568 = vld [vmem:[%s540 + $0x6c] sm:$0xf]
  %v569 = vld [vmem:[%s540 + $0x70] sm:$0xf]
  %v570 = vld [vmem:[%s540 + $0x74] sm:$0xf]
  %v571 = vld [vmem:[%s540 + $0x78] sm:$0xf]
  %v572 = vld [vmem:[%s540 + $0x7c] sm:$0xf]
  %v605 = vunpack.c.l.b16 %v541
  %v606 = vunpack.c.l.b16 %v542
  %v607 = vunpack.c.l.b16 %v543
  %v608 = vunpack.c.l.b16 %v544
  %v609 = vunpack.c.l.b16 %v545
  %v610 = vunpack.c.l.b16 %v546
  %v611 = vunpack.c.l.b16 %v547
  %v612 = vunpack.c.l.b16 %v548
  %v613 = vunpack.c.l.b16 %v549
  %v614 = vunpack.c.l.b16 %v550
  %v615 = vunpack.c.l.b16 %v551
  %v616 = vunpack.c.l.b16 %v552
  %v617 = vunpack.c.l.b16 %v553
  %v618 = vunpack.c.l.b16 %v554
  %v619 = vunpack.c.l.b16 %v555
  %v620 = vunpack.c.l.b16 %v556
  %v621 = vunpack.c.l.b16 %v557
  %v622 = vunpack.c.l.b16 %v558
  %v623 = vunpack.c.l.b16 %v559
  %v624 = vunpack.c.l.b16 %v560
  %v625 = vunpack.c.l.b16 %v561
  %v626 = vunpack.c.l.b16 %v562
  %v627 = vunpack.c.l.b16 %v563
  %v628 = vunpack.c.l.b16 %v564
  %v629 = vunpack.c.l.b16 %v565
  %v630 = vunpack.c.l.b16 %v566
  %v631 = vunpack.c.l.b16 %v567
  %v632 = vunpack.c.l.b16 %v568
  %v633 = vunpack.c.l.b16 %v569
  %v634 = vunpack.c.l.b16 %v570
  %v635 = vunpack.c.l.b16 %v571
  %v636 = vunpack.c.l.b16 %v572
  %v637 = vpack.c.b16 %v606, %v605
  %v638 = vpack.c.b16 %v608, %v607
  %v639 = vpack.c.b16 %v610, %v609
  %v640 = vpack.c.b16 %v612, %v611
  %v641 = vpack.c.b16 %v614, %v613
  %v642 = vpack.c.b16 %v616, %v615
  %v643 = vpack.c.b16 %v618, %v617
  %v644 = vpack.c.b16 %v620, %v619
  %v645 = vpack.c.b16 %v622, %v621
  %v646 = vpack.c.b16 %v624, %v623
  %v647 = vpack.c.b16 %v626, %v625
  %v648 = vpack.c.b16 %v628, %v627
  %v649 = vpack.c.b16 %v630, %v629
  %v650 = vpack.c.b16 %v632, %v631
  %v651 = vpack.c.b16 %v634, %v633
  %v652 = vpack.c.b16 %v636, %v635
  %669 = vmatprep.subr.bf16.mxu0 0
  %670 = vmatpush1.bf16.msra.mxu0 %v637
  %671 = vmatprep.subr.bf16.mxu0 0
  %672 = vmatpush1.bf16.msra.mxu0 %v638
  %673 = vmatprep.subr.bf16.mxu0 0
  %674 = vmatpush1.bf16.msra.mxu0 %v639
  %675 = vmatprep.subr.bf16.mxu0 0
  %676 = vmatpush1.bf16.msra.mxu0 %v640
  %677 = vmatprep.subr.bf16.mxu0 0
  %678 = vmatpush1.bf16.msra.mxu0 %v641
  %679 = vmatprep.subr.bf16.mxu0 0
  %680 = vmatpush1.bf16.msra.mxu0 %v642
  %681 = vmatprep.subr.bf16.mxu0 0
  %682 = vmatpush1.bf16.msra.mxu0 %v643
  %683 = vmatprep.subr.bf16.mxu0 0
  %684 = vmatpush1.bf16.msra.mxu0 %v644
  %685 = vmatprep.subr.bf16.mxu0 0
  %686 = vmatpush1.bf16.msra.mxu0 %v645
  %687 = vmatprep.subr.bf16.mxu0 0
  %688 = vmatpush1.bf16.msra.mxu0 %v646
  %689 = vmatprep.subr.bf16.mxu0 0
  %690 = vmatpush1.bf16.msra.mxu0 %v647
  %691 = vmatprep.subr.bf16.mxu0 0
  %692 = vmatpush1.bf16.msra.mxu0 %v648
  %693 = vmatprep.subr.bf16.mxu0 0
  %694 = vmatpush1.bf16.msra.mxu0 %v649
  %695 = vmatprep.subr.bf16.mxu0 0
  %696 = vmatpush1.bf16.msra.mxu0 %v650
  %697 = vmatprep.subr.bf16.mxu0 0
  %698 = vmatpush1.bf16.msra.mxu0 %v651
  %699 = vmatprep.subr.bf16.mxu0 0
  %700 = vmatpush1.bf16.msra.mxu0 %v652
  %701 = vmatprep.mubr.bf16.mxu0 %v56
  %702 = vmatmul.mubr.bf16.gmra.mrb[0].mxu0 %v55
  %v703 = vpop.f32.mrb[0].mxu0
  %v704 = vadd.f32 0.0, %v703
  %v705 = vpop.f32.mrb[0].mxu0
  %v706 = vpop.f32.mrb[0].mxu0
  %v707 = vadd.f32 0.0, %v706
  %v708 = vpop.f32.mrb[0].mxu0
  %709 = vdwg.mxu0
  %v710 = vmax.f32 %v538, %v704
  %v711 = vmax.f32 %v539, %v707
  %v712 = vld [vmem:[%s2] sm:$0xff]
  %v713 = vld [vmem:[%s2 + $0x8] sm:$0xff]
  %715 = vset.pattern.permute.xlu0 0
  %716 = vperm.xlu0 %715, %v712
  %v717 = vpop.permute.xlu0 %716
  %720 = vset.pattern.permute.xlu0 0
  %721 = vperm.xlu0 %720, %v713
  %v722 = vpop.permute.xlu0 %721
  %v724 = vadd.f32 %v710, %v717
  %v725 = vadd.f32 %v711, %v722
  %v726 = vmax.f32 %v724, 0.0
  %v727 = vmax.f32 %v725, 0.0
  %728 = vst [vmem:[%s3] sm:$0xff] %v726
  %729 = vst [vmem:[%s3 + $0x8] sm:$0xff] %v727
  // Predicated region
  $region14: #{net_forward.4} parent=0 // pred_check
    _
  $region15: #{net_forward.4} parent=0 // pred_check_branch
    %731 = sbr.rel (0) target = $region17
  $region16: #{net_forward.4} parent=0 // pred_region
    _
  $region17: #{net_forward.4} parent=0 // pred_fallthru
    _
  // Predicated region
  $region18: #{net_forward.4} parent=0 // pred_check
    _
  $region19: #{net_forward.4} parent=0 // pred_check_branch
    %733 = sbr.rel (0) target = $region21
  $region20: #{net_forward.4} parent=0 // pred_region
    _
  $region21: #{net_forward.4} parent=0 // pred_fallthru
    _

// kernel: net_forward.5
$region0: #{net_forward.5}
  #allocation0 [shape = 'u32[]', space=smem, size = 0x4, offset = 0x4, fixed_abs, tag = 'smem constant byte address 0x4 - core index']
  #allocation1 [shape = 'u32[144,128]{1,0:T(1,128)}', space=vmem, size = 0x12000, scoped, tag = 'internal scratch']
  %s0 = inlined_call_operand.vmem [shape: bf16[2,400], index: 0, kind: input, shape index: {}]
  %s1 = inlined_call_operand.vmem [shape: bf16[400,128], index: 1, kind: input, shape index: {}]
  %s2 = inlined_call_operand.vmem [shape: f32[1,128], index: 2, kind: input, shape index: {}]
  %s3 = inlined_call_operand.vmem [shape: bf16[128,128], index: 3, kind: input, shape index: {}]
  %s4 = inlined_call_operand.vmem [shape: f32[1,128], index: 4, kind: input, shape index: {}]
  %s5 = inlined_call_operand.vmem [shape: bf16[128,128], index: 5, kind: input, shape index: {}]
  %s6 = inlined_call_operand.vmem [shape: f32[1,128], index: 6, kind: input, shape index: {}]
  %s7 = inlined_call_operand.hbm [shape: f32[2,128], index: 7, kind: output, shape index: {}]
  %s8 = sld [smem:[#allocation0]]
  $region38: #{net_forward.5} parent=0
    _
  %s10 = ssub.s32 1, %s8
  %s11 = scalar_select 0, %s10, %s8
  $region1: #{net_forward.5} parent=0
    #allocation2 [shape = 'u8[1024]{0}', space=vmem, size = 0x400, scoped, tag = 'output window, operand 0, single buffered']
    #allocation3 [shape = 's32[1]{0}', space=sflag, size = 0x4, scoped, tag = 'scoped memory for net_forward.5']
    %12 = vsyncpa [#allocation3], 0
    // Predicated region
    $region2: #{net_forward.5} parent=1 // pred_check
      _
    $region3: #{net_forward.5} parent=1 // pred_check_branch
      %14 = sbr.rel (0) target = $region5
    $region4: #{net_forward.5} parent=1 // pred_region
      _
    $region5: #{net_forward.5} parent=1 // pred_fallthru
      _
    // Predicated region
    $region6: #{net_forward.5} parent=1 // pred_check
      _
    $region7: #{net_forward.5} parent=1 // pred_check_branch
      %16 = sbr.rel (0) target = $region9
    $region8: #{net_forward.5} parent=1 // pred_region
      _
    $region9: #{net_forward.5} parent=1 // pred_fallthru
      _
    // Predicated region
    $region10: #{net_forward.5} parent=1 // pred_check
      _
    $region11: #{net_forward.5} parent=1 // pred_check_branch
      %18 = sbr.rel (0) target = $region13
    $region12: #{net_forward.5} parent=1 // pred_region
      _
    $region13: #{net_forward.5} parent=1 // pred_fallthru
      _
    // Predicated region
    $region14: #{net_forward.5} parent=1 // pred_check
      _
    $region15: #{net_forward.5} parent=1 // pred_check_branch
      %20 = sbr.rel (0) target = $region17
    $region16: #{net_forward.5} parent=1 // pred_region
      _
    $region17: #{net_forward.5} parent=1 // pred_fallthru
      _
    // Predicated region
    $region18: #{net_forward.5} parent=1 // pred_check
      _
    $region19: #{net_forward.5} parent=1 // pred_check_branch
      %22 = sbr.rel (0) target = $region21
    $region20: #{net_forward.5} parent=1 // pred_region
      _
    $region21: #{net_forward.5} parent=1 // pred_fallthru
      _
    // Predicated region
    $region22: #{net_forward.5} parent=1 // pred_check
      _
    $region23: #{net_forward.5} parent=1 // pred_check_branch
      %24 = sbr.rel (0) target = $region25
    $region24: #{net_forward.5} parent=1 // pred_region
      _
    $region25: #{net_forward.5} parent=1 // pred_fallthru
      _
    // Predicated region
    $region26: #{net_forward.5} parent=1 // pred_check
      _
    $region27: #{net_forward.5} parent=1 // pred_check_branch
      %26 = sbr.rel (0) target = $region29
    $region28: #{net_forward.5} parent=1 // pred_region
      _
    $region29: #{net_forward.5} parent=1 // pred_fallthru
      _
    %v28 = vld [vmem:[%s0] sm:$0xf]
    %v29 = vld [vmem:[%s1] sm:$0xf]
    %v30 = vld [vmem:[%s1 + $0x4] sm:$0xf]
    %v31 = vld [vmem:[%s1 + $0x8] sm:$0xf]
    %v32 = vld [vmem:[%s1 + $0xc] sm:$0xf]
    %v33 = vld [vmem:[%s1 + $0x10] sm:$0xf]
    %v34 = vld [vmem:[%s1 + $0x14] sm:$0xf]
    %v35 = vld [vmem:[%s1 + $0x18] sm:$0xf]
    %v36 = vld [vmem:[%s1 + $0x1c] sm:$0xf]
    %v37 = vld [vmem:[%s1 + $0x20] sm:$0xf]
    %v38 = vld [vmem:[%s1 + $0x24] sm:$0xf]
    %v39 = vld [vmem:[%s1 + $0x28] sm:$0xf]
    %v40 = vld [vmem:[%s1 + $0x2c] sm:$0xf]
    %v41 = vld [vmem:[%s1 + $0x30] sm:$0xf]
    %v42 = vld [vmem:[%s1 + $0x34] sm:$0xf]
    %v43 = vld [vmem:[%s1 + $0x38] sm:$0xf]
    %v44 = vld [vmem:[%s1 + $0x3c] sm:$0xf]
    %v45 = vld [vmem:[%s1 + $0x40] sm:$0xf]
    %v46 = vld [vmem:[%s1 + $0x44] sm:$0xf]
    %v47 = vld [vmem:[%s1 + $0x48] sm:$0xf]
    %v48 = vld [vmem:[%s1 + $0x4c] sm:$0xf]
    %v49 = vld [vmem:[%s1 + $0x50] sm:$0xf]
    %v50 = vld [vmem:[%s1 + $0x54] sm:$0xf]
    %v51 = vld [vmem:[%s1 + $0x58] sm:$0xf]
    %v52 = vld [vmem:[%s1 + $0x5c] sm:$0xf]
    %v53 = vld [vmem:[%s1 + $0x60] sm:$0xf]
    %v54 = vld [vmem:[%s1 + $0x64] sm:$0xf]
    %v55 = vld [vmem:[%s1 + $0x68] sm:$0xf]
    %v56 = vld [vmem:[%s1 + $0x6c] sm:$0xf]
    %v57 = vld [vmem:[%s1 + $0x70] sm:$0xf]
    %v58 = vld [vmem:[%s1 + $0x74] sm:$0xf]
    %v59 = vld [vmem:[%s1 + $0x78] sm:$0xf]
    %v60 = vld [vmem:[%s1 + $0x7c] sm:$0xf]
    %v61 = vld [vmem:[%s1 + $0x80] sm:$0xf]
    %v62 = vld [vmem:[%s1 + $0x84] sm:$0xf]
    %v63 = vld [vmem:[%s1 + $0x88] sm:$0xf]
    %v64 = vld [vmem:[%s1 + $0x8c] sm:$0xf]
    %v65 = vld [vmem:[%s1 + $0x90] sm:$0xf]
    %v66 = vld [vmem:[%s1 + $0x94] sm:$0xf]
    %v67 = vld [vmem:[%s1 + $0x98] sm:$0xf]
    %v68 = vld [vmem:[%s1 + $0x9c] sm:$0xf]
    %v69 = vld [vmem:[%s1 + $0xa0] sm:$0xf]
    %v70 = vld [vmem:[%s1 + $0xa4] sm:$0xf]
    %v71 = vld [vmem:[%s1 + $0xa8] sm:$0xf]
    %v72 = vld [vmem:[%s1 + $0xac] sm:$0xf]
    %v73 = vld [vmem:[%s1 + $0xb0] sm:$0xf]
    %v74 = vld [vmem:[%s1 + $0xb4] sm:$0xf]
    %v75 = vld [vmem:[%s1 + $0xb8] sm:$0xf]
    %v76 = vld [vmem:[%s1 + $0xbc] sm:$0xf]
    %v77 = vld [vmem:[%s1 + $0xc0] sm:$0xf]
    %v78 = vld [vmem:[%s1 + $0xc4] sm:$0xf]
    %v79 = vld [vmem:[%s2] sm:$0x1]
    %v81 = vlaneseq
    %v82 = vshrl.u32 %v81, 7
    %v83 = vsub.s32 0, %v82
    %v84 = vrot.slane %v79, %v83
    %v88 = vunpack.c.l.s4 1966171168
    %v89 = vunpack.c.0.s8 %v88
    %v90 = vlaneseq
    %v91 = vshrl.u32 %v90, 7
    %v92 = vsub.s32 %v89, %v91
    %v93 = vrot.slane %v28, %v92
    %v94 = vcombine.high %v93, %v93
    %v96 = vunpack.c.l.s4 1966171168
    %v97 = vunpack.c.0.s8 %v96
    %v98 = vlaneseq
    %v99 = vshrl.u32 %v98, 7
    %v100 = vsub.s32 %v97, %v99
    %v101 = vrot.slane %v93, %v100
    %v103 = vunpack.c.l.s4 1966171168
    %v104 = vunpack.c.0.s8 %v103
    %v105 = vlaneseq
    %v106 = vshrl.u32 %v105, 7
    %v107 = vsub.s32 %v104, %v106
    %v108 = vrot.slane %v94, %v107
    %v109 = vcombine.high %v101, %v101
    %v110 = vcombine.high %v108, %v108
    %v164 = vunpack.c.l.b16 %v29
    %v165 = vunpack.c.l.b16 %v30
    %v166 = vunpack.c.l.b16 %v31
    %v167 = vunpack.c.l.b16 %v32
    %v168 = vunpack.c.l.b16 %v33
    %v169 = vunpack.c.l.b16 %v34
    %v170 = vunpack.c.l.b16 %v35
    %v171 = vunpack.c.l.b16 %v36
    %v172 = vunpack.c.l.b16 %v37
    %v173 = vunpack.c.l.b16 %v38
    %v174 = vunpack.c.l.b16 %v39
    %v175 = vunpack.c.l.b16 %v40
    %v176 = vunpack.c.l.b16 %v41
    %v177 = vunpack.c.l.b16 %v42
    %v178 = vunpack.c.l.b16 %v43
    %v179 = vunpack.c.l.b16 %v44
    %v180 = vunpack.c.l.b16 %v45
    %v181 = vunpack.c.l.b16 %v46
    %v182 = vunpack.c.l.b16 %v47
    %v183 = vunpack.c.l.b16 %v48
    %v184 = vunpack.c.l.b16 %v49
    %v185 = vunpack.c.l.b16 %v50
    %v186 = vunpack.c.l.b16 %v51
    %v187 = vunpack.c.l.b16 %v52
    %v188 = vunpack.c.l.b16 %v53
    %v189 = vunpack.c.l.b16 %v54
    %v190 = vunpack.c.l.b16 %v55
    %v191 = vunpack.c.l.b16 %v56
    %v192 = vunpack.c.l.b16 %v57
    %v193 = vunpack.c.l.b16 %v58
    %v194 = vunpack.c.l.b16 %v59
    %v195 = vunpack.c.l.b16 %v60
    %v196 = vunpack.c.l.b16 %v61
    %v197 = vunpack.c.l.b16 %v62
    %v198 = vunpack.c.l.b16 %v63
    %v199 = vunpack.c.l.b16 %v64
    %v200 = vunpack.c.l.b16 %v65
    %v201 = vunpack.c.l.b16 %v66
    %v202 = vunpack.c.l.b16 %v67
    %v203 = vunpack.c.l.b16 %v68
    %v204 = vunpack.c.l.b16 %v69
    %v205 = vunpack.c.l.b16 %v70
    %v206 = vunpack.c.l.b16 %v71
    %v207 = vunpack.c.l.b16 %v72
    %v208 = vunpack.c.l.b16 %v73
    %v209 = vunpack.c.l.b16 %v74
    %v210 = vunpack.c.l.b16 %v75
    %v211 = vunpack.c.l.b16 %v76
    %v212 = vunpack.c.l.b16 %v77
    %v213 = vunpack.c.l.b16 %v78
    %v214 = vpack.c.b16 %v165, %v164
    %v215 = vpack.c.b16 %v167, %v166
    %v216 = vpack.c.b16 %v169, %v168
    %v217 = vpack.c.b16 %v171, %v170
    %v218 = vpack.c.b16 %v173, %v172
    %v219 = vpack.c.b16 %v175, %v174
    %v220 = vpack.c.b16 %v177, %v176
    %v221 = vpack.c.b16 %v179, %v178
    %v222 = vpack.c.b16 %v181, %v180
    %v223 = vpack.c.b16 %v183, %v182
    %v224 = vpack.c.b16 %v185, %v184
    %v225 = vpack.c.b16 %v187, %v186
    %v226 = vpack.c.b16 %v189, %v188
    %v227 = vpack.c.b16 %v191, %v190
    %v228 = vpack.c.b16 %v193, %v192
    %v229 = vpack.c.b16 %v195, %v194
    %v230 = vpack.c.b16 %v197, %v196
    %v231 = vpack.c.b16 %v199, %v198
    %v232 = vpack.c.b16 %v201, %v200
    %v233 = vpack.c.b16 %v203, %v202
    %v234 = vpack.c.b16 %v205, %v204
    %v235 = vpack.c.b16 %v207, %v206
    %v236 = vpack.c.b16 %v209, %v208
    %v237 = vpack.c.b16 %v211, %v210
    %v238 = vpack.c.b16 %v213, %v212
    %vm264 = vcmask 130048
    %v266 = vsel %vm264, %v110, 0
    %268 = vmatprep.subr.bf16.mxu0 0
    %269 = vmatpush1.bf16.msra.mxu0 %v214
    %270 = vmatprep.subr.bf16.mxu0 0
    %271 = vmatpush1.bf16.msra.mxu0 %v215
    %272 = vmatprep.subr.bf16.mxu0 0
    %273 = vmatpush1.bf16.msra.mxu0 %v216
    %274 = vmatprep.subr.bf16.mxu0 0
    %275 = vmatpush1.bf16.msra.mxu0 %v217
    %276 = vmatprep.subr.bf16.mxu0 0
    %277 = vmatpush1.bf16.msra.mxu0 %v218
    %278 = vmatprep.subr.bf16.mxu0 0
    %279 = vmatpush1.bf16.msra.mxu0 %v219
    %280 = vmatprep.subr.bf16.mxu0 0
    %281 = vmatpush1.bf16.msra.mxu0 %v220
    %282 = vmatprep.subr.bf16.mxu0 0
    %283 = vmatpush1.bf16.msra.mxu0 %v221
    %284 = vmatprep.subr.bf16.mxu0 0
    %285 = vmatpush1.bf16.msra.mxu0 %v222
    %286 = vmatprep.subr.bf16.mxu0 0
    %287 = vmatpush1.bf16.msra.mxu0 %v223
    %288 = vmatprep.subr.bf16.mxu0 0
    %289 = vmatpush1.bf16.msra.mxu0 %v224
    %290 = vmatprep.subr.bf16.mxu0 0
    %291 = vmatpush1.bf16.msra.mxu0 %v225
    %292 = vmatprep.subr.bf16.mxu0 0
    %293 = vmatpush1.bf16.msra.mxu0 %v226
    %294 = vmatprep.subr.bf16.mxu0 0
    %295 = vmatpush1.bf16.msra.mxu0 %v227
    %296 = vmatprep.subr.bf16.mxu0 0
    %297 = vmatpush1.bf16.msra.mxu0 %v228
    %298 = vmatprep.subr.bf16.mxu0 0
    %299 = vmatpush1.bf16.msra.mxu0 %v229
    %300 = vmatprep.mubr.bf16.mxu0 %v108
    %301 = vmatmul.mubr.bf16.gmra.mrb[0].mxu0 %v101
    %v302 = vpop.f32.mrb[0].mxu0
    %v303 = vadd.f32 %v84, %v302
    %v304 = vpop.f32.mrb[0].mxu0
    %v305 = vpop.f32.mrb[0].mxu0
    %v306 = vpop.f32.mrb[0].mxu0
    %307 = vdwg.mxu0
    %308 = vmatprep.subr.bf16.mxu0 0
    %309 = vmatpush1.bf16.msra.mxu0 %v230
    %310 = vmatprep.subr.bf16.mxu0 0
    %311 = vmatpush1.bf16.msra.mxu0 %v231
    %312 = vmatprep.subr.bf16.mxu0 0
    %313 = vmatpush1.bf16.msra.mxu0 %v232
    %314 = vmatprep.subr.bf16.mxu0 0
    %315 = vmatpush1.bf16.msra.mxu0 %v233
    %316 = vmatprep.subr.bf16.mxu0 0
    %317 = vmatpush1.bf16.msra.mxu0 %v234
    %318 = vmatprep.subr.bf16.mxu0 0
    %319 = vmatpush1.bf16.msra.mxu0 %v235
    %320 = vmatprep.subr.bf16.mxu0 0
    %321 = vmatpush1.bf16.msra.mxu0 %v236
    %322 = vmatprep.subr.bf16.mxu0 0
    %323 = vmatpush1.bf16.msra.mxu0 %v237
    %324 = vmatprep.subr.bf16.mxu0 0
    %325 = vmatpush1.bf16.msra.mxu0 %v238
    %326 = vmatprep.subr.bf16.mxu0 0
    %327 = vmatpush1.bf16.msra.mxu0 0
    %328 = vmatprep.subr.bf16.mxu0 0
    %329 = vmatpush1.bf16.msra.mxu0 0
    %330 = vmatprep.subr.bf16.mxu0 0
    %331 = vmatpush1.bf16.msra.mxu0 0
    %332 = vmatprep.subr.bf16.mxu0 0
    %333 = vmatpush1.bf16.msra.mxu0 0
    %334 = vmatprep.subr.bf16.mxu0 0
    %335 = vmatpush1.bf16.msra.mxu0 0
    %336 = vmatprep.subr.bf16.mxu0 0
    %337 = vmatpush1.bf16.msra.mxu0 0
    %338 = vmatprep.subr.bf16.mxu0 0
    %339 = vmatpush1.bf16.msra.mxu0 0
    %340 = vmatprep.mubr.bf16.mxu0 %v266
    %341 = vmatmul.mubr.bf16.gmra.mrb[0].mxu0 %v109
    %v342 = vpop.f32.mrb[0].mxu0
    %v343 = vadd.f32 %v303, %v342
    %v344 = vpop.f32.mrb[0].mxu0
    %v345 = vpop.f32.mrb[0].mxu0
    %v346 = vpop.f32.mrb[0].mxu0
    %347 = vdwg.mxu0
    %v348 = vmax.f32 %v343, 0.0
    %v349 = vpack.c.bf16 %v348, %v348
    %v350 = vld [vmem:[%s3] sm:$0xf]
    %v351 = vld [vmem:[%s3 + $0x4] sm:$0xf]
    %v352 = vld [vmem:[%s3 + $0x8] sm:$0xf]
    %v353 = vld [vmem:[%s3 + $0xc] sm:$0xf]
    %v354 = vld [vmem:[%s3 + $0x10] sm:$0xf]
    %v355 = vld [vmem:[%s3 + $0x14] sm:$0xf]
    %v356 = vld [vmem:[%s3 + $0x18] sm:$0xf]
    %v357 = vld [vmem:[%s3 + $0x1c] sm:$0xf]
    %v358 = vld [vmem:[%s3 + $0x20] sm:$0xf]
    %v359 = vld [vmem:[%s3 + $0x24] sm:$0xf]
    %v360 = vld [vmem:[%s3 + $0x28] sm:$0xf]
    %v361 = vld [vmem:[%s3 + $0x2c] sm:$0xf]
    %v362 = vld [vmem:[%s3 + $0x30] sm:$0xf]
    %v363 = vld [vmem:[%s3 + $0x34] sm:$0xf]
    %v364 = vld [vmem:[%s3 + $0x38] sm:$0xf]
    %v365 = vld [vmem:[%s3 + $0x3c] sm:$0xf]
    %v366 = vld [vmem:[%s4] sm:$0x1]
    %v368 = vlaneseq
    %v369 = vshrl.u32 %v368, 7
    %v370 = vsub.s32 0, %v369
    %v371 = vrot.slane %v366, %v370
    %v389 = vunpack.c.l.b16 %v350
    %v390 = vunpack.c.l.b16 %v351
    %v391 = vunpack.c.l.b16 %v352
    %v392 = vunpack.c.l.b16 %v353
    %v393 = vunpack.c.l.b16 %v354
    %v394 = vunpack.c.l.b16 %v355
    %v395 = vunpack.c.l.b16 %v356
    %v396 = vunpack.c.l.b16 %v357
    %v397 = vunpack.c.l.b16 %v358
    %v398 = vunpack.c.l.b16 %v359
    %v399 = vunpack.c.l.b16 %v360
    %v400 = vunpack.c.l.b16 %v361
    %v401 = vunpack.c.l.b16 %v362
    %v402 = vunpack.c.l.b16 %v363
    %v403 = vunpack.c.l.b16 %v364
    %v404 = vunpack.c.l.b16 %v365
    %v405 = vpack.c.b16 %v390, %v389
    %v406 = vpack.c.b16 %v392, %v391
    %v407 = vpack.c.b16 %v394, %v393
    %v408 = vpack.c.b16 %v396, %v395
    %v409 = vpack.c.b16 %v398, %v397
    %v410 = vpack.c.b16 %v400, %v399
    %v411 = vpack.c.b16 %v402, %v401
    %v412 = vpack.c.b16 %v404, %v403
    %421 = vmatprep.subr.bf16.mxu0 0
    %422 = vmatpush1.bf16.msra.mxu0 %v405
    %423 = vmatprep.subr.bf16.mxu0 0
    %424 = vmatpush1.bf16.msra.mxu0 %v406
    %425 = vmatprep.subr.bf16.mxu0 0
    %426 = vmatpush1.bf16.msra.mxu0 %v407
    %427 = vmatprep.subr.bf16.mxu0 0
    %428 = vmatpush1.bf16.msra.mxu0 %v408
    %429 = vmatprep.subr.bf16.mxu0 0
    %430 = vmatpush1.bf16.msra.mxu0 %v409
    %431 = vmatprep.subr.bf16.mxu0 0
    %432 = vmatpush1.bf16.msra.mxu0 %v410
    %433 = vmatprep.subr.bf16.mxu0 0
    %434 = vmatpush1.bf16.msra.mxu0 %v411
    %435 = vmatprep.subr.bf16.mxu0 0
    %436 = vmatpush1.bf16.msra.mxu0 %v412
    %437 = vmatprep.subr.bf16.mxu0 0
    %438 = vmatpush1.bf16.msra.mxu0 0
    %439 = vmatprep.subr.bf16.mxu0 0
    %440 = vmatpush1.bf16.msra.mxu0 0
    %441 = vmatprep.subr.bf16.mxu0 0
    %442 = vmatpush1.bf16.msra.mxu0 0
    %443 = vmatprep.subr.bf16.mxu0 0
    %444 = vmatpush1.bf16.msra.mxu0 0
    %445 = vmatprep.subr.bf16.mxu0 0
    %446 = vmatpush1.bf16.msra.mxu0 0
    %447 = vmatprep.subr.bf16.mxu0 0
    %448 = vmatpush1.bf16.msra.mxu0 0
    %449 = vmatprep.subr.bf16.mxu0 0
    %450 = vmatpush1.bf16.msra.mxu0 0
    %451 = vmatprep.subr.bf16.mxu0 0
    %452 = vmatpush1.bf16.msra.mxu0 0
    %453 = vmatprep.mubr.bf16.mxu0 0
    %454 = vmatmul.mubr.bf16.gmra.mrb[0].mxu0 %v349
    %v455 = vpop.f32.mrb[0].mxu0
    %v456 = vadd.f32 %v371, %v455
    %v457 = vpop.f32.mrb[0].mxu0
    %v458 = vpop.f32.mrb[0].mxu0
    %v459 = vpop.f32.mrb[0].mxu0
    %460 = vdwg.mxu0
    %v461 = vmax.f32 %v456, 0.0
    %v462 = vpack.c.bf16 %v461, %v461
    %v463 = vld [vmem:[%s5] sm:$0xf]
    %v464 = vld [vmem:[%s5 + $0x4] sm:$0xf]
    %v465 = vld [vmem:[%s5 + $0x8] sm:$0xf]
    %v466 = vld [vmem:[%s5 + $0xc] sm:$0xf]
    %v467 = vld [vmem:[%s5 + $0x10] sm:$0xf]
    %v468 = vld [vmem:[%s5 + $0x14] sm:$0xf]
    %v469 = vld [vmem:[%s5 + $0x18] sm:$0xf]
    %v470 = vld [vmem:[%s5 + $0x1c] sm:$0xf]
    %v471 = vld [vmem:[%s5 + $0x20] sm:$0xf]
    %v472 = vld [vmem:[%s5 + $0x24] sm:$0xf]
    %v473 = vld [vmem:[%s5 + $0x28] sm:$0xf]
    %v474 = vld [vmem:[%s5 + $0x2c] sm:$0xf]
    %v475 = vld [vmem:[%s5 + $0x30] sm:$0xf]
    %v476 = vld [vmem:[%s5 + $0x34] sm:$0xf]
    %v477 = vld [vmem:[%s5 + $0x38] sm:$0xf]
    %v478 = vld [vmem:[%s5 + $0x3c] sm:$0xf]
    %v479 = vld [vmem:[%s6] sm:$0x1]
    %v481 = vlaneseq
    %v482 = vshrl.u32 %v481, 7
    %v483 = vsub.s32 0, %v482
    %v484 = vrot.slane %v479, %v483
    %v502 = vunpack.c.l.b16 %v463
    %v503 = vunpack.c.l.b16 %v464
    %v504 = vunpack.c.l.b16 %v465
    %v505 = vunpack.c.l.b16 %v466
    %v506 = vunpack.c.l.b16 %v467
    %v507 = vunpack.c.l.b16 %v468
    %v508 = vunpack.c.l.b16 %v469
    %v509 = vunpack.c.l.b16 %v470
    %v510 = vunpack.c.l.b16 %v471
    %v511 = vunpack.c.l.b16 %v472
    %v512 = vunpack.c.l.b16 %v473
    %v513 = vunpack.c.l.b16 %v474
    %v514 = vunpack.c.l.b16 %v475
    %v515 = vunpack.c.l.b16 %v476
    %v516 = vunpack.c.l.b16 %v477
    %v517 = vunpack.c.l.b16 %v478
    %v518 = vpack.c.b16 %v503, %v502
    %v519 = vpack.c.b16 %v505, %v504
    %v520 = vpack.c.b16 %v507, %v506
    %v521 = vpack.c.b16 %v509, %v508
    %v522 = vpack.c.b16 %v511, %v510
    %v523 = vpack.c.b16 %v513, %v512
    %v524 = vpack.c.b16 %v515, %v514
    %v525 = vpack.c.b16 %v517, %v516
    %534 = vmatprep.subr.bf16.mxu0 0
    %535 = vmatpush1.bf16.msra.mxu0 %v518
    %536 = vmatprep.subr.bf16.mxu0 0
    %537 = vmatpush1.bf16.msra.mxu0 %v519
    %538 = vmatprep.subr.bf16.mxu0 0
    %539 = vmatpush1.bf16.msra.mxu0 %v520
    %540 = vmatprep.subr.bf16.mxu0 0
    %541 = vmatpush1.bf16.msra.mxu0 %v521
    %542 = vmatprep.subr.bf16.mxu0 0
    %543 = vmatpush1.bf16.msra.mxu0 %v522
    %544 = vmatprep.subr.bf16.mxu0 0
    %545 = vmatpush1.bf16.msra.mxu0 %v523
    %546 = vmatprep.subr.bf16.mxu0 0
    %547 = vmatpush1.bf16.msra.mxu0 %v524
    %548 = vmatprep.subr.bf16.mxu0 0
    %549 = vmatpush1.bf16.msra.mxu0 %v525
    %550 = vmatprep.subr.bf16.mxu0 0
    %551 = vmatpush1.bf16.msra.mxu0 0
    %552 = vmatprep.subr.bf16.mxu0 0
    %553 = vmatpush1.bf16.msra.mxu0 0
    %554 = vmatprep.subr.bf16.mxu0 0
    %555 = vmatpush1.bf16.msra.mxu0 0
    %556 = vmatprep.subr.bf16.mxu0 0
    %557 = vmatpush1.bf16.msra.mxu0 0
    %558 = vmatprep.subr.bf16.mxu0 0
    %559 = vmatpush1.bf16.msra.mxu0 0
    %560 = vmatprep.subr.bf16.mxu0 0
    %561 = vmatpush1.bf16.msra.mxu0 0
    %562 = vmatprep.subr.bf16.mxu0 0
    %563 = vmatpush1.bf16.msra.mxu0 0
    %564 = vmatprep.subr.bf16.mxu0 0
    %565 = vmatpush1.bf16.msra.mxu0 0
    %566 = vmatprep.mubr.bf16.mxu0 0
    %567 = vmatmul.mubr.bf16.gmra.mrb[0].mxu0 %v462
    %v568 = vpop.f32.mrb[0].mxu0
    %v569 = vadd.f32 %v484, %v568
    %v570 = vpop.f32.mrb[0].mxu0
    %v571 = vpop.f32.mrb[0].mxu0
    %v572 = vpop.f32.mrb[0].mxu0
    %573 = vdwg.mxu0
    %574 = vst [vmem:[#allocation2] sm:$0x3] %v569
    // Predicated region
    $region30: #{net_forward.5} parent=1 // pred_check
      _
    $region31: #{net_forward.5} parent=1 // pred_check_branch
      %576 = sbr.rel (0) target = $region33
    $region32: #{net_forward.5} parent=1 // pred_region
      %s578 = ssub.s32 32, 32
      %579 = vsyncadd [#allocation3], %s578
      %s581 = sshll.u32 [#allocation2], 4
      %s582 = int_to_ptr.vmem [resolvable:$true] %s581
      %584 = dma.vmem_to_hbm [thread:$0]  %s582, 32, %s7, [#allocation3]
    $region33: #{net_forward.5} parent=1 // pred_fallthru
      _
    // Predicated region
    $region34: #{net_forward.5} parent=1 // pred_check
      _
    $region35: #{net_forward.5} parent=1 // pred_check_branch
      %586 = sbr.rel (0) target = $region37
    $region36: #{net_forward.5} parent=1 // pred_region
      %587 = dma.done [#allocation3], 32
    $region37: #{net_forward.5} parent=1 // pred_fallthru
      _
    %588 = vsyncpa [#allocation3], 1

</llo_original>
